<compile_context>
chip_gen: v5e
topology: v5e:2x2
jax: 0.10.0
libtpu: 0.0.40
codegen_flags: <defaults>
</compile_context>

<pallas_src>
import functools
import math

import jax
import jax.numpy as jnp
import numpy as np
from jax.experimental import pallas as pl
from jax.experimental.pallas import tpu as pltpu


def _round_up(x, m):
    return ((x + m - 1) // m) * m


def _vmem_bytes(shape, itemsize):
    """Approx VMEM footprint of a block whose last two dims are (8,128)-tiled
    (sublane packing halves the sublane tile count for 16-bit types)."""
    shape = tuple(shape)
    if len(shape) == 1:
        shape = (1,) + shape
    *lead, s, l = shape
    sub = 8 * (4 // itemsize)
    n = 1
    for d in lead:
        n *= d
    return n * _round_up(max(s, 1), sub) * _round_up(max(l, 1), 128) * itemsize


# ---------------------------------------------------------------------------
# Kernel: one output row band.
#   main_ref  : (1, core_h, Wp, C_in)   band "core" rows     (compute dtype)
#   halo_ref  : (1, halo_pad, Wp, C_in) band halo rows        (compute dtype)
#   w_ref     : (KH*KW*C_in, C_out)     fused-tap weights     (compute dtype)
#   b_ref     : (1, C_out)              bias                  (f32)
#   o_ref     : (1, 1, TOH*OW, C_out)   output rows           (out dtype)
#   patch_ref : (TOH*OW, KH*KW*C_in)    VMEM im2col scratch   (compute dtype)
# ---------------------------------------------------------------------------
def _conv_fused_kernel(main_ref, halo_ref, w_ref, b_ref, o_ref, patch_ref, *,
                       KH, KW, stride, dilation, TOH, OW, C_in,
                       negative_slope):
    # Band window = core rows followed by halo rows (leading-axis concat).
    window = jnp.concatenate([main_ref[0], halo_ref[0]], axis=0)
    M = TOH * OW

    # ---- assemble the patch LHS in VMEM (review #1) -------------------------
    # Channel-minor layout => each tap is a static slice + leading-dim reshape
    # (no relayout), written into its own K-column strip of the scratch.
    # TODO(synk): for stride > 1 the strided slice may trigger per-tap
    #             relayout copies (review #12); this config uses stride=1.
    for i in range(KH):
        for j in range(KW):
            tap = jax.lax.slice(
                window,
                (i * dilation, j * dilation, 0),
                (i * dilation + (TOH - 1) * stride + 1,
                 j * dilation + (OW - 1) * stride + 1,
                 C_in),
                (stride, stride, 1))                      # (TOH, OW, C_in)
            k0 = (i * KW + j) * C_in
            patch_ref[:, k0:k0 + C_in] = tap.reshape(M, C_in)

    # ---- single fused matmul, bias folded, pure value chain (#2, #3) --------
    acc = jnp.dot(patch_ref[...], w_ref[...],
                  preferred_element_type=jnp.float32) + b_ref[...]
    acc = jnp.where(acc >= 0, acc, negative_slope * acc)     # LeakyReLU(0.2)
    o_ref[0, 0] = acc.astype(o_ref.dtype)


def conv2d_layer_forward(x, weight, bias, *, stride=1, padding=0, dilation=1,
                         negative_slope=0.2, compute_dtype=jnp.bfloat16,
                         out_dtype=jnp.float32):
    """ZeroPad2d(padding) -> Conv2d(stride, dilation) -> LeakyReLU(0.2).

    x:      (N, C_in, H, W)   float32, NCHW (PyTorch convention)
    weight: (C_out, C_in, KH, KW)
    bias:   (C_out,)
    returns (N, C_out, OH, OW) float32, NCHW
    """
    N, C_in, H, W = x.shape
    C_out, _, KH, KW = weight.shape
    KK = KH * KW

    # --- geometry -------------------------------------------------------------
    Hp, Wp = H + 2 * padding, W + 2 * padding
    OH = (Hp - dilation * (KH - 1) - 1) // stride + 1
    OW = (Wp - dilation * (KW - 1) - 1) // stride + 1
    assert OH >= 1 and OW >= 1

    OW_pad = _round_up(OW, 8)                       # clean sublane merges
    Wp_need = (KW - 1) * dilation + (OW_pad - 1) * stride + 1
    Wp_pad = max(Wp, Wp_need)

    halo = max((KH - 1) * dilation + 1 - stride, 0)
    halo_pad = max(8, _round_up(halo, 8))
    # TOH*stride must be a multiple of halo_pad so the halo block index is
    # exact (overlap expressed with plain Blocked specs, no HBM duplication).
    align = halo_pad // math.gcd(halo_pad, stride)

    comp_isz = np.dtype(compute_dtype).itemsize
    out_isz = np.dtype(out_dtype).itemsize

    # --- generation-aware VMEM budget (review #8) -----------------------------
    try:
        vmem_cap = int(pltpu.get_tpu_info().vmem_capacity_bytes)
    except Exception:
        vmem_cap = 64 * 1024 * 1024                 # conservative (v7x)
    budget = min(int(vmem_cap * 0.6), 96 * 1024 * 1024)
    vmem_limit = min(int(vmem_cap * 0.75), 112 * 1024 * 1024)

    def fits(toh):
        core_h = toh * stride
        total = (2 * _vmem_bytes((core_h, Wp_pad, C_in), comp_isz)     # core x2
                 + 2 * _vmem_bytes((halo_pad, Wp_pad, C_in), comp_isz)  # halo x2
                 + _vmem_bytes((toh * OW_pad, KK * C_in), comp_isz)     # patch
                 + 2 * _vmem_bytes((toh * OW_pad, C_out), out_isz)      # out x2
                 + 2 * _vmem_bytes((KK * C_in, C_out), comp_isz)        # weights
                 + 2 * _vmem_bytes((1, C_out), 4)
                 + (64 << 10))
        return total <= budget

    TOH = _round_up(OH, align)
    while TOH > align and not fits(TOH):
        nxt = _round_up(max(TOH // 2, align), align)
        TOH = nxt if nxt < TOH else align

    # v7x megacore: guarantee >= 2 grid steps when possible (review #7).
    if N * (-(-OH // TOH)) < 2 and OH > align:
        TOH = min(TOH, _round_up(-(-OH // 2), align))

    n_t = -(-OH // TOH)
    core_h = TOH * stride
    ratio = core_h // halo_pad
    H_tot = n_t * core_h + halo_pad
    M = TOH * OW_pad

    # --- layout prep: NCHW -> NHWC, zero pad, cast ----------------------------
    x_nhwc = jnp.transpose(x, (0, 2, 3, 1))
    x_pad = jnp.pad(
        x_nhwc,
        ((0, 0),
         (padding, H_tot - H - padding),
         (padding, Wp_pad - W - padding),
         (0, 0))).astype(compute_dtype)

    # Fused-tap weights: K order = (kh, kw, c_in) matching the patch layout.
    # (No C_out lane padding: output stays exact-width => ~16x fewer HBM
    #  write bytes for small C_out; MXU pads N internally.)
    w2 = jnp.transpose(weight, (2, 3, 1, 0)).reshape(KK * C_in, C_out)
    w2 = w2.astype(compute_dtype)
    b2 = bias.astype(jnp.float32).reshape(1, C_out)

    kernel = functools.partial(
        _conv_fused_kernel, KH=KH, KW=KW, stride=stride, dilation=dilation,
        TOH=TOH, OW=OW_pad, C_in=C_in, negative_slope=negative_slope)

    flops = 2 * N * n_t * M * KK * C_in * C_out
    bytes_accessed = (x_pad.size * comp_isz
                      + N * n_t * halo_pad * Wp_pad * C_in * comp_isz
                      + w2.size * comp_isz + b2.size * 4
                      + N * n_t * M * C_out * out_isz)

    out = pl.pallas_call(
        kernel,
        out_shape=jax.ShapeDtypeStruct((N, n_t, M, C_out), out_dtype),
        grid_spec=pltpu.PrefetchScalarGridSpec(
            num_scalar_prefetch=0,
            grid=(N, n_t),
            in_specs=[
                # Band core rows (each input row fetched exactly once).
                pl.BlockSpec((1, core_h, Wp_pad, C_in),
                             lambda n, t: (n, t, 0, 0)),
                # Band halo rows = first rows of the next band (review #5).
                pl.BlockSpec((1, halo_pad, Wp_pad, C_in),
                             lambda n, t: (n, (t + 1) * ratio, 0, 0)),
                # Grid-invariant weights/bias (kept resident; tiny, so the
                # default double buffer is harmless — review #11).
                pl.BlockSpec((KK * C_in, C_out), lambda n, t: (0, 0)),
                pl.BlockSpec((1, C_out), lambda n, t: (0, 0)),
            ],
            out_specs=pl.BlockSpec((1, 1, M, C_out),
                                   lambda n, t: (n, t, 0, 0)),
            scratch_shapes=[pltpu.VMEM((M, KK * C_in), compute_dtype)],
        ),
        compiler_params=pltpu.CompilerParams(
            dimension_semantics=("parallel", "parallel"),
            vmem_limit_bytes=vmem_limit),
        cost_estimate=pl.CostEstimate(flops=flops, transcendentals=0,
                                      bytes_accessed=bytes_accessed),
    )(x_pad, x_pad, w2, b2)

    # (N, n_t, TOH*OW_pad, C_out) -> (N, OH, OW, C_out) -> NCHW for parity.
    out = out.reshape(N, n_t * TOH, OW_pad, C_out)[:, :OH, :OW, :]
    return jnp.transpose(out, (0, 3, 1, 2)).astype(jnp.float32)


if __name__ == "__main__":
    # Module config: Conv2dLayer(in_channels=4, out_channels=8, kernel_size=3,
    #                            stride=1, padding=1, dilation=1,
    #                            pad_type='zero', activation='lrelu',
    #                            norm='none', sn=False)
    N, C_in, H, W = 2, 4, 16, 16
    C_out, KH, KW = 8, 3, 3
    stride, padding, dilation = 1, 1, 1

    key = jax.random.PRNGKey(0)
    kx, kw_, kb = jax.random.split(key, 3)

    x = jax.random.normal(kx, (N, C_in, H, W), dtype=jnp.float32)
    fan_in = C_in * KH * KW
    bound = 1.0 / np.sqrt(fan_in)
    weight = jax.random.uniform(kw_, (C_out, C_in, KH, KW), jnp.float32,
                                minval=-bound, maxval=bound)
    bias = jax.random.uniform(kb, (C_out,), jnp.float32,
                              minval=-bound, maxval=bound)

    # Reference: XLA conv + bias + LeakyReLU(0.2), f32-accurate.
    ref = jax.lax.conv_general_dilated(
        x, weight, window_strides=(stride, stride),
        padding=[(padding, padding), (padding, padding)],
        rhs_dilation=(dilation, dilation),
        dimension_numbers=("NCHW", "OIHW", "NCHW"),
        precision=jax.lax.Precision.HIGHEST,
    ) + bias.reshape(1, C_out, 1, 1)
    ref = jnp.where(ref >= 0, ref, 0.2 * ref)

    # f32 compute path.
    y32 = conv2d_layer_forward(x, weight, bias, stride=stride, padding=padding,
                               dilation=dilation, compute_dtype=jnp.float32)
    y32 = jax.block_until_ready(y32)
    np.testing.assert_allclose(np.asarray(y32), np.asarray(ref),
                               rtol=1e-2, atol=1e-2)

    # bf16 matmul inputs / f32 accumulation (default fast path).
    y16 = conv2d_layer_forward(x, weight, bias, stride=stride, padding=padding,
                               dilation=dilation)
    y16 = jax.block_until_ready(y16)
    np.testing.assert_allclose(np.asarray(y16), np.asarray(ref),
                               rtol=5e-2, atol=5e-2)

    assert y16.shape == (N, C_out, H, W)
    print("KERNEL_OK")
</pallas_src>

<mosaic_0001>
module attributes {stable_mosaic.version = 11 : i64} {
  func.func @_conv_fused_kernel(%arg0: i32, %arg1: i32, %arg2: memref<1x16x18x4xf32, #tpu.memory_space<vmem>>, %arg3: memref<1x8x18x4xf32, #tpu.memory_space<vmem>>, %arg4: memref<36x8xf32, #tpu.memory_space<vmem>>, %arg5: memref<1x8xf32, #tpu.memory_space<vmem>>, %arg6: memref<1x1x256x8xf32, #tpu.memory_space<vmem>>, %arg7: memref<256x36xf32, #tpu.memory_space<vmem>>) attributes {dimension_semantics = [#tpu.dimension_semantics<parallel>, #tpu.dimension_semantics<parallel>], iteration_bounds = array<i64: 2, 1>, scalar_prefetch = 0 : i64, scratch_operands = 1 : i64, tpu.core_type = #tpu.core_type<tc>, window_params = [{transform_indices = @transform_0, window_bounds = array<i64: 1, 16, 18, 4>}, {transform_indices = @transform_1, window_bounds = array<i64: 1, 8, 18, 4>}, {pipeline_mode = #tpu.pipeline_mode<synchronous>, transform_indices = @transform_2, window_bounds = array<i64: 36, 8>}, {pipeline_mode = #tpu.pipeline_mode<synchronous>, transform_indices = @transform_3, window_bounds = array<i64: 1, 8>}, {transform_indices = @transform_4, window_bounds = array<i64: 1, 1, 256, 8>}]} {
    %c0 = arith.constant 0 : index
    %c0_0 = arith.constant 0 : index
    %c0_1 = arith.constant 0 : index
    %c0_2 = arith.constant 0 : index
    %0 = vector.load %arg2[%c0, %c0_0, %c0_1, %c0_2] : memref<1x16x18x4xf32, #tpu.memory_space<vmem>>, vector<1x16x18x4xf32>
    %1 = vector.shape_cast %0 : vector<1x16x18x4xf32> to vector<16x18x4xf32>
    %c0_3 = arith.constant 0 : index
    %c0_4 = arith.constant 0 : index
    %c0_5 = arith.constant 0 : index
    %c0_6 = arith.constant 0 : index
    %2 = vector.load %arg3[%c0_3, %c0_4, %c0_5, %c0_6] : memref<1x8x18x4xf32, #tpu.memory_space<vmem>>, vector<1x8x18x4xf32>
    %3 = vector.shape_cast %2 : vector<1x8x18x4xf32> to vector<8x18x4xf32>
    %4 = tpu.concatenate %1, %3 in 0 : vector<16x18x4xf32>, vector<8x18x4xf32> -> vector<24x18x4xf32>
    %5 = vector.extract_strided_slice %4 {offsets = [0, 0, 0], sizes = [16, 16, 4], strides = [1, 1, 1]} : vector<24x18x4xf32> to vector<16x16x4xf32>
    %6 = vector.shape_cast %5 : vector<16x16x4xf32> to vector<256x4xf32>
    %c0_7 = arith.constant 0 : index
    %c0_8 = arith.constant 0 : index
    %7 = vector.load %arg7[%c0_7, %c0_8] : memref<256x36xf32, #tpu.memory_space<vmem>>, vector<256x4xf32>
    tpu.vector_store %arg7[%c0_7, %c0_8], %6 {strides = array<i32>} : memref<256x36xf32, #tpu.memory_space<vmem>>, vector<256x4xf32>,
    %8 = vector.extract_strided_slice %4 {offsets = [0, 1, 0], sizes = [16, 16, 4], strides = [1, 1, 1]} : vector<24x18x4xf32> to vector<16x16x4xf32>
    %9 = vector.shape_cast %8 : vector<16x16x4xf32> to vector<256x4xf32>
    %c0_9 = arith.constant 0 : index
    %c4 = arith.constant 4 : index
    %10 = vector.load %arg7[%c0_9, %c4] : memref<256x36xf32, #tpu.memory_space<vmem>>, vector<256x4xf32>
    tpu.vector_store %arg7[%c0_9, %c4], %9 {strides = array<i32>} : memref<256x36xf32, #tpu.memory_space<vmem>>, vector<256x4xf32>,
    %11 = vector.extract_strided_slice %4 {offsets = [0, 2, 0], sizes = [16, 16, 4], strides = [1, 1, 1]} : vector<24x18x4xf32> to vector<16x16x4xf32>
    %12 = vector.shape_cast %11 : vector<16x16x4xf32> to vector<256x4xf32>
    %c0_10 = arith.constant 0 : index
    %c8 = arith.constant 8 : index
    %13 = vector.load %arg7[%c0_10, %c8] : memref<256x36xf32, #tpu.memory_space<vmem>>, vector<256x4xf32>
    tpu.vector_store %arg7[%c0_10, %c8], %12 {strides = array<i32>} : memref<256x36xf32, #tpu.memory_space<vmem>>, vector<256x4xf32>,
    %14 = vector.extract_strided_slice %4 {offsets = [1, 0, 0], sizes = [16, 16, 4], strides = [1, 1, 1]} : vector<24x18x4xf32> to vector<16x16x4xf32>
    %15 = vector.shape_cast %14 : vector<16x16x4xf32> to vector<256x4xf32>
    %c0_11 = arith.constant 0 : index
    %c12 = arith.constant 12 : index
    %16 = vector.load %arg7[%c0_11, %c12] : memref<256x36xf32, #tpu.memory_space<vmem>>, vector<256x4xf32>
    tpu.vector_store %arg7[%c0_11, %c12], %15 {strides = array<i32>} : memref<256x36xf32, #tpu.memory_space<vmem>>, vector<256x4xf32>,
    %17 = vector.extract_strided_slice %4 {offsets = [1, 1, 0], sizes = [16, 16, 4], strides = [1, 1, 1]} : vector<24x18x4xf32> to vector<16x16x4xf32>
    %18 = vector.shape_cast %17 : vector<16x16x4xf32> to vector<256x4xf32>
    %c0_12 = arith.constant 0 : index
    %c16 = arith.constant 16 : index
    %19 = vector.load %arg7[%c0_12, %c16] : memref<256x36xf32, #tpu.memory_space<vmem>>, vector<256x4xf32>
    tpu.vector_store %arg7[%c0_12, %c16], %18 {strides = array<i32>} : memref<256x36xf32, #tpu.memory_space<vmem>>, vector<256x4xf32>,
    %20 = vector.extract_strided_slice %4 {offsets = [1, 2, 0], sizes = [16, 16, 4], strides = [1, 1, 1]} : vector<24x18x4xf32> to vector<16x16x4xf32>
    %21 = vector.shape_cast %20 : vector<16x16x4xf32> to vector<256x4xf32>
    %c0_13 = arith.constant 0 : index
    %c20 = arith.constant 20 : index
    %22 = vector.load %arg7[%c0_13, %c20] : memref<256x36xf32, #tpu.memory_space<vmem>>, vector<256x4xf32>
    tpu.vector_store %arg7[%c0_13, %c20], %21 {strides = array<i32>} : memref<256x36xf32, #tpu.memory_space<vmem>>, vector<256x4xf32>,
    %23 = vector.extract_strided_slice %4 {offsets = [2, 0, 0], sizes = [16, 16, 4], strides = [1, 1, 1]} : vector<24x18x4xf32> to vector<16x16x4xf32>
    %24 = vector.shape_cast %23 : vector<16x16x4xf32> to vector<256x4xf32>
    %c0_14 = arith.constant 0 : index
    %c24 = arith.constant 24 : index
    %25 = vector.load %arg7[%c0_14, %c24] : memref<256x36xf32, #tpu.memory_space<vmem>>, vector<256x4xf32>
    tpu.vector_store %arg7[%c0_14, %c24], %24 {strides = array<i32>} : memref<256x36xf32, #tpu.memory_space<vmem>>, vector<256x4xf32>,
    %26 = vector.extract_strided_slice %4 {offsets = [2, 1, 0], sizes = [16, 16, 4], strides = [1, 1, 1]} : vector<24x18x4xf32> to vector<16x16x4xf32>
    %27 = vector.shape_cast %26 : vector<16x16x4xf32> to vector<256x4xf32>
    %c0_15 = arith.constant 0 : index
    %c28 = arith.constant 28 : index
    %28 = vector.load %arg7[%c0_15, %c28] : memref<256x36xf32, #tpu.memory_space<vmem>>, vector<256x4xf32>
    tpu.vector_store %arg7[%c0_15, %c28], %27 {strides = array<i32>} : memref<256x36xf32, #tpu.memory_space<vmem>>, vector<256x4xf32>,
    %29 = vector.extract_strided_slice %4 {offsets = [2, 2, 0], sizes = [16, 16, 4], strides = [1, 1, 1]} : vector<24x18x4xf32> to vector<16x16x4xf32>
    %30 = vector.shape_cast %29 : vector<16x16x4xf32> to vector<256x4xf32>
    %c0_16 = arith.constant 0 : index
    %c32 = arith.constant 32 : index
    %31 = vector.load %arg7[%c0_16, %c32] : memref<256x36xf32, #tpu.memory_space<vmem>>, vector<256x4xf32>
    tpu.vector_store %arg7[%c0_16, %c32], %30 {strides = array<i32>} : memref<256x36xf32, #tpu.memory_space<vmem>>, vector<256x4xf32>,
    %c0_17 = arith.constant 0 : index
    %c0_18 = arith.constant 0 : index
    %32 = vector.load %arg7[%c0_17, %c0_18] : memref<256x36xf32, #tpu.memory_space<vmem>>, vector<256x36xf32>
    %c0_19 = arith.constant 0 : index
    %c0_20 = arith.constant 0 : index
    %33 = vector.load %arg4[%c0_19, %c0_20] : memref<36x8xf32, #tpu.memory_space<vmem>>, vector<36x8xf32>
    %cst = arith.constant dense<0.000000e+00> : vector<256x8xf32>
    %34 = tpu.matmul %32, %33, %cst {dimension_numbers = #tpu.dot_dimension_numbers<[1], [0], [0], [1], [0, 0, 1, 1], [], []>} : vector<256x36xf32>, vector<36x8xf32>, vector<256x8xf32> -> vector<256x8xf32>
    %c0_21 = arith.constant 0 : index
    %c0_22 = arith.constant 0 : index
    %35 = vector.load %arg5[%c0_21, %c0_22] : memref<1x8xf32, #tpu.memory_space<vmem>>, vector<1x8xf32>
    %36 = vector.broadcast %35 : vector<1x8xf32> to vector<256x8xf32>
    %37 = arith.addf %34, %36 : vector<256x8xf32>
    %cst_23 = arith.constant 0.000000e+00 : f32
    %38 = vector.broadcast %cst_23 : f32 to vector<256x8xf32>
    %39 = arith.cmpf oge, %37, %38 : vector<256x8xf32>
    %cst_24 = arith.constant 2.000000e-01 : f32
    %40 = vector.broadcast %cst_24 : f32 to vector<256x8xf32>
    %41 = arith.mulf %40, %37 : vector<256x8xf32>
    %42 = arith.select %39, %37, %41 : vector<256x8xi1>, vector<256x8xf32>
    %c0_25 = arith.constant 0 : index
    %c0_26 = arith.constant 0 : index
    %c0_27 = arith.constant 0 : index
    %c0_28 = arith.constant 0 : index
    %43 = vector.load %arg6[%c0_25, %c0_26, %c0_27, %c0_28] : memref<1x1x256x8xf32, #tpu.memory_space<vmem>>, vector<1x1x256x8xf32>
    %44 = vector.shape_cast %43 : vector<1x1x256x8xf32> to vector<256x8xf32>
    %45 = vector.shape_cast %42 : vector<256x8xf32> to vector<1x1x256x8xf32>
    tpu.vector_store %arg6[%c0_25, %c0_26, %c0_27, %c0_28], %45 {strides = array<i32>} : memref<1x1x256x8xf32, #tpu.memory_space<vmem>>, vector<1x1x256x8xf32>,
    return
  }
  func.func @transform_0(%arg0: i32, %arg1: i32) -> (i32, i32, i32, i32) {
    %c0_i32 = arith.constant 0 : i32
    %c0_i32_0 = arith.constant 0 : i32
    %c0_i32_1 = arith.constant 0 : i32
    return %arg0, %arg1, %c0_i32, %c0_i32_0 : i32, i32, i32, i32
  }
  func.func @transform_1(%arg0: i32, %arg1: i32) -> (i32, i32, i32, i32) {
    %c1_i32 = arith.constant 1 : i32
    %0 = arith.addi %arg1, %c1_i32 : i32
    %c2_i32 = arith.constant 2 : i32
    %1 = arith.muli %0, %c2_i32 : i32
    %c0_i32 = arith.constant 0 : i32
    %c0_i32_0 = arith.constant 0 : i32
    %c0_i32_1 = arith.constant 0 : i32
    return %arg0, %1, %c0_i32, %c0_i32_0 : i32, i32, i32, i32
  }
  func.func @transform_2(%arg0: i32, %arg1: i32) -> (i32, i32) {
    %c0_i32 = arith.constant 0 : i32
    %c0_i32_0 = arith.constant 0 : i32
    %c0_i32_1 = arith.constant 0 : i32
    return %c0_i32, %c0_i32_0 : i32, i32
  }
  func.func @transform_3(%arg0: i32, %arg1: i32) -> (i32, i32) {
    %c0_i32 = arith.constant 0 : i32
    %c0_i32_0 = arith.constant 0 : i32
    %c0_i32_1 = arith.constant 0 : i32
    return %c0_i32, %c0_i32_0 : i32, i32
  }
  func.func @transform_4(%arg0: i32, %arg1: i32) -> (i32, i32, i32, i32) {
    %c0_i32 = arith.constant 0 : i32
    %c0_i32_0 = arith.constant 0 : i32
    %c0_i32_1 = arith.constant 0 : i32
    return %arg0, %arg1, %c0_i32, %c0_i32_0 : i32, i32, i32, i32
  }
}

</mosaic_0001>

<llo_original>
// kernel: tpu_custom_call.1
$region0: #{tpu_custom_call.1}
  #allocation0 [shape = 'u32[]', space=smem, size = 0x4, offset = 0x4, fixed_abs, tag = 'smem constant byte address 0x4 - core index']
  #allocation1 [shape = 'u32[72,128]{1,0:T(1,128)}', space=vmem, size = 0x9000, scoped, tag = 'internal scratch']
  #allocation2 [shape = 'f32[256,36]{1,0:T(8,128)}', space=vmem, size = 0x20000, scoped, tag = 'scratch operand']
  %s0 = inlined_call_operand.vmem [shape: f32[2,24,18,4], index: 0, kind: input, shape index: {}]
  %s1 = inlined_call_operand.vmem [shape: f32[2,24,18,4], index: 1, kind: input, shape index: {}]
  %s2 = inlined_call_operand.vmem [shape: f32[36,8], index: 2, kind: input, shape index: {}]
  %s3 = inlined_call_operand.vmem [shape: f32[1,8], index: 3, kind: input, shape index: {}]
  %s4 = inlined_call_operand.vmem [shape: f32[2,1,256,8], index: 4, kind: output, shape index: {}]
  %s5 = sld [smem:[#allocation0]]
  $region49: #{tpu_custom_call.1} parent=0
    _
  %s7 = ssub.s32 1, %s5
  %s8 = scalar_select 0, %s7, %s5
  loop: start=0, step=1, limit=4
  $region2: #{tpu_custom_call.1} parent=0 // loop_pre_header
    _
  $region3: #{tpu_custom_call.1} parent=0 // loop_header
    %s10 = sphi 0, %s14
    %p11 = scmp.ge.s32.totalorder %s10, 4
    %s17 = sphi 0, %s29
    %s18 = sphi 0, %s25
    %s19 = sphi 0, %s17
    %s20 = sphi 0, %s18
    %s21 = sphi 0, %s19
    %s22 = sphi 0, %s20
    %s34 = sphi 0, %s36
    %s37 = sphi 0, %s34
    %s38 = sphi 0, %s37
    %s54 = sphi 0, %s38
    %s66 = sphi 0, %s68
    %s69 = sphi 0, %s66
    %s70 = sphi 0, %s69
    %s86 = sphi 0, %s70
    %s90 = sphi 0, %s90
    %s92 = sphi 0, %s90
    %s93 = sphi 0, %s92
    %s107 = sphi 0, %s93
    %s111 = sphi 0, %s111
    %s113 = sphi 0, %s111
    %s114 = sphi 0, %s113
    %s128 = sphi 0, %s114
    %s136 = sphi 0, %s138
    %s139 = sphi 0, %s136
    %s140 = sphi 0, %s139
    %s156 = sphi 0, %s140
  $region4: #{tpu_custom_call.1} parent=0 // loop_header_branch
    %13 = sbr.rel (%p11) target = $region8
  $region5: #{tpu_custom_call.1} parent=0 // loop_body
    %s15 = ssub.s32 %s10, 1
    %s16 = ssub.s32 %s10, 2
    %s23 = sadd.s32 1, %s18
    %p24 = scmp.ge.s32.totalorder %s23, 1
    %s25 = scalar_select %p24, 0, %s23
    %s26 = sadd.s32 1, %s17
    %s27 = scalar_select %p24, %s26, %s17
    %p28 = scmp.ge.s32.totalorder %s27, 2
    %s29 = scalar_select %p28, 0, %s27
    %s30 = ssub.s32 %s17, %s29
    %s31 = ssub.s32 %s18, %s25
    %s32 = sor.u32 %s30, %s31
    %p33 = scmp.eq.s32.totalorder %s32, 0
    %s35 = sadd.s32 %s34, 1
    %s36 = scalar_select %p33, %s34, %s35
    %p39 = pneg %p33
    %p40 = scmp.eq.s32.totalorder %s10, 1
    %p41 = por %p39, %p40
    %p42 = scmp.ne.s32.totalorder %s34, %s37
    %p43 = scmp.eq.s32.totalorder %s10, 0
    %p44 = por %p42, %p43
    %p45 = scmp.ne.s32.totalorder %s34, %s37
    %p46 = scmp.eq.s32.totalorder %s15, 1
    %p47 = por %p45, %p46
    %p48 = scmp.ne.s32.totalorder %s37, %s38
    %p49 = scmp.eq.s32.totalorder %s15, 0
    %p50 = por %p48, %p49
    %p51 = scmp.ne.s32.totalorder %s37, %s38
    %p52 = scmp.eq.s32.totalorder %s16, 1
    %p53 = por %p51, %p52
    %p55 = scmp.ne.s32.totalorder %s38, %s54
    %p56 = scmp.eq.s32.totalorder %s16, 0
    %p57 = por %p55, %p56
    %s58 = sadd.s32 %s18, 1
    %s59 = smul.u32 %s58, 2
    %s60 = sadd.s32 %s25, 1
    %s61 = smul.u32 %s60, 2
    %s62 = ssub.s32 %s17, %s29
    %s63 = ssub.s32 %s59, %s61
    %s64 = sor.u32 %s62, %s63
    %p65 = scmp.eq.s32.totalorder %s64, 0
    %s67 = sadd.s32 %s66, 1
    %s68 = scalar_select %p65, %s66, %s67
    %p71 = pneg %p65
    %p72 = scmp.eq.s32.totalorder %s10, 1
    %p73 = por %p71, %p72
    %p74 = scmp.ne.s32.totalorder %s66, %s69
    %p75 = scmp.eq.s32.totalorder %s10, 0
    %p76 = por %p74, %p75
    %p77 = scmp.ne.s32.totalorder %s66, %s69
    %p78 = scmp.eq.s32.totalorder %s15, 1
    %p79 = por %p77, %p78
    %p80 = scmp.ne.s32.totalorder %s69, %s70
    %p81 = scmp.eq.s32.totalorder %s15, 0
    %p82 = por %p80, %p81
    %p83 = scmp.ne.s32.totalorder %s69, %s70
    %p84 = scmp.eq.s32.totalorder %s16, 1
    %p85 = por %p83, %p84
    %p87 = scmp.ne.s32.totalorder %s70, %s86
    %p88 = scmp.eq.s32.totalorder %s16, 0
    %p89 = por %p87, %p88
    %s91 = sadd.s32 %s90, 1
    %p94 = scmp.eq.s32.totalorder %s10, 1
    %p95 = scmp.ne.s32.totalorder %s90, %s92
    %p96 = scmp.eq.s32.totalorder %s10, 0
    %p97 = por %p95, %p96
    %p98 = scmp.ne.s32.totalorder %s90, %s92
    %p99 = scmp.eq.s32.totalorder %s15, 1
    %p100 = por %p98, %p99
    %p101 = scmp.ne.s32.totalorder %s92, %s93
    %p102 = scmp.eq.s32.totalorder %s15, 0
    %p103 = por %p101, %p102
    %p104 = scmp.ne.s32.totalorder %s92, %s93
    %p105 = scmp.eq.s32.totalorder %s16, 1
    %p106 = por %p104, %p105
    %p108 = scmp.ne.s32.totalorder %s93, %s107
    %p109 = scmp.eq.s32.totalorder %s16, 0
    %p110 = por %p108, %p109
    %s112 = sadd.s32 %s111, 1
    %p115 = scmp.eq.s32.totalorder %s10, 1
    %p116 = scmp.ne.s32.totalorder %s111, %s113
    %p117 = scmp.eq.s32.totalorder %s10, 0
    %p118 = por %p116, %p117
    %p119 = scmp.ne.s32.totalorder %s111, %s113
    %p120 = scmp.eq.s32.totalorder %s15, 1
    %p121 = por %p119, %p120
    %p122 = scmp.ne.s32.totalorder %s113, %s114
    %p123 = scmp.eq.s32.totalorder %s15, 0
    %p124 = por %p122, %p123
    %p125 = scmp.ne.s32.totalorder %s113, %s114
    %p126 = scmp.eq.s32.totalorder %s16, 1
    %p127 = por %p125, %p126
    %p129 = scmp.ne.s32.totalorder %s114, %s128
    %p130 = scmp.eq.s32.totalorder %s16, 0
    %p131 = por %p129, %p130
    %s132 = ssub.s32 %s17, %s29
    %s133 = ssub.s32 %s18, %s25
    %s134 = sor.u32 %s132, %s133
    %p135 = scmp.eq.s32.totalorder %s134, 0
    %s137 = sadd.s32 %s136, 1
    %s138 = scalar_select %p135, %s136, %s137
    %p141 = pneg %p135
    %p142 = scmp.eq.s32.totalorder %s10, 1
    %p143 = por %p141, %p142
    %p144 = scmp.ne.s32.totalorder %s136, %s139
    %p145 = scmp.eq.s32.totalorder %s10, 0
    %p146 = por %p144, %p145
    %p147 = scmp.ne.s32.totalorder %s136, %s139
    %p148 = scmp.eq.s32.totalorder %s15, 1
    %p149 = por %p147, %p148
    %p150 = scmp.ne.s32.totalorder %s139, %s140
    %p151 = scmp.eq.s32.totalorder %s15, 0
    %p152 = por %p150, %p151
    %p153 = scmp.ne.s32.totalorder %s139, %s140
    %p154 = scmp.eq.s32.totalorder %s16, 1
    %p155 = por %p153, %p154
    %p157 = scmp.ne.s32.totalorder %s140, %s156
    %p158 = scmp.eq.s32.totalorder %s16, 0
    %p159 = por %p157, %p158
    %p160 = scmp.le.s32.totalorder 1, %s10
    %p161 = scmp.lt.s32.totalorder %s10, 3
    %p162 = pnand %p160, %p161
    %p163 = pneg %p162
    // Predicated region
    $region9: #{tpu_custom_call.1} parent=5 // pred_check
      _
    $region10: #{tpu_custom_call.1} parent=5 // pred_check_branch
      %165 = sbr.rel (%p162) target = $region12
    $region11: #{tpu_custom_call.1} parent=5 // pred_region
      %s166 = ssub.s32 %s10, 1
      // Predicated region
      $region13: #{tpu_custom_call.1} parent=11 // pred_check
        %p167 = pneg %p103
      $region14: #{tpu_custom_call.1} parent=11 // pred_check_branch
        %169 = sbr.rel (%p167) target = $region16
      $region15: #{tpu_custom_call.1} parent=11 // pred_region
        _
      $region16: #{tpu_custom_call.1} parent=11 // pred_fallthru
        _
      // Predicated region
      $region17: #{tpu_custom_call.1} parent=11 // pred_check
        %p170 = pneg %p124
      $region18: #{tpu_custom_call.1} parent=11 // pred_check_branch
        %172 = sbr.rel (%p170) target = $region20
      $region19: #{tpu_custom_call.1} parent=11 // pred_region
        _
      $region20: #{tpu_custom_call.1} parent=11 // pred_fallthru
        _
    $region12: #{tpu_custom_call.1} parent=5 // pred_fallthru
      _
    %p173 = scmp.lt.s32.totalorder %s10, 2
    // Predicated region
    $region21: #{tpu_custom_call.1} parent=5 // pred_check
      %p174 = pneg %p173
    $region22: #{tpu_custom_call.1} parent=5 // pred_check_branch
      %176 = sbr.rel (%p174) target = $region24
    $region23: #{tpu_custom_call.1} parent=5 // pred_region
      // Predicated region
      $region25: #{tpu_custom_call.1} parent=23 // pred_check
        %p177 = pneg %p44
      $region26: #{tpu_custom_call.1} parent=23 // pred_check_branch
        %179 = sbr.rel (%p177) target = $region28
      $region27: #{tpu_custom_call.1} parent=23 // pred_region
        %s180 = smul.u32 16, %s18
        %s181 = ssub.s32 24, %s180
        %p182 = scmp.lt.s32.totalorder %s181, 16
        %s183 = scalar_select %p182, %s181, 16
        %s184 = smul.u32 8, %s183
        %s185 = smul.u32 %s184, 3
        %p186 = scmp.lt.s32.totalorder %s17, 1
        %s187 = scalar_select %p186, %s17, 1
        %p188 = scmp.lt.s32.totalorder %s180, 23
        %s189 = scalar_select %p188, %s180, 23
        %s190 = smul.addr %s189, 3
        %s191 = smul.addr %s187, 72
        %s192 = sadd.s32 %s190, %s191
        %s193 = smul.addr %s192, 8
        %s194 = scalar_lea.vmem %s0, %s193
        %s195 = smul.u32 16, %s18
        %s196 = ssub.s32 24, %s195
        %p197 = scmp.lt.s32.totalorder %s196, 16
        %s198 = scalar_select %p197, %s196, 16
        %s199 = smul.u32 8, %s198
        %s200 = smul.u32 %s199, 3
      $region28: #{tpu_custom_call.1} parent=23 // pred_fallthru
        _
      // Predicated region
      $region29: #{tpu_custom_call.1} parent=23 // pred_check
        %p201 = pneg %p76
      $region30: #{tpu_custom_call.1} parent=23 // pred_check_branch
        %203 = sbr.rel (%p201) target = $region32
      $region31: #{tpu_custom_call.1} parent=23 // pred_region
        %s204 = sadd.s32 %s18, 1
        %s205 = smul.u32 %s204, 2
        %s206 = smul.u32 8, %s205
        %p207 = scmp.lt.s32.totalorder %s17, 1
        %s208 = scalar_select %p207, %s17, 1
        %p209 = scmp.lt.s32.totalorder %s206, 23
        %s210 = scalar_select %p209, %s206, 23
        %s211 = smul.addr %s210, 3
        %s212 = smul.addr %s208, 72
        %s213 = sadd.s32 %s211, %s212
        %s214 = smul.addr %s213, 8
        %s215 = scalar_lea.vmem %s1, %s214
        %s216 = sadd.s32 %s18, 1
        %s217 = smul.u32 %s216, 2
        %s218 = smul.u32 8, %s217
      $region32: #{tpu_custom_call.1} parent=23 // pred_fallthru
        _
    $region24: #{tpu_custom_call.1} parent=5 // pred_fallthru
      _
    %p219 = scmp.le.s32.totalorder 1, %s10
    %p220 = scmp.lt.s32.totalorder %s10, 3
    %p221 = pnand %p219, %p220
    %p222 = pneg %p221
    // Predicated region
    $region33: #{tpu_custom_call.1} parent=5 // pred_check
      _
    $region34: #{tpu_custom_call.1} parent=5 // pred_check_branch
      %224 = sbr.rel (%p221) target = $region36
    $region35: #{tpu_custom_call.1} parent=5 // pred_region
      %s225 = ssub.s32 %s10, 1
      %s226 = smul.u32 16, %s20
      %s227 = ssub.s32 24, %s226
      %p228 = scmp.lt.s32.totalorder %s227, 16
      %s229 = scalar_select %p228, %s227, 16
      %s230 = smul.u32 8, %s229
      %s231 = smul.u32 %s230, 3
      %p232 = scmp.lt.s32.totalorder %s19, 1
      %s233 = scalar_select %p232, %s19, 1
      %p234 = scmp.lt.s32.totalorder %s226, 23
      %s235 = scalar_select %p234, %s226, 23
      %s236 = smul.addr %s235, 3
      %s237 = smul.addr %s233, 72
      %s238 = sadd.s32 %s236, %s237
      %s239 = smul.addr %s238, 8
      %s240 = scalar_lea.vmem %s0, %s239
      %p241 = pneg %p50
      %p242 = pneg %p47
      %s243 = sadd.s32 %s20, 1
      %s244 = smul.u32 %s243, 2
      %s245 = smul.u32 8, %s244
      %p246 = scmp.lt.s32.totalorder %s19, 1
      %s247 = scalar_select %p246, %s19, 1
      %p248 = scmp.lt.s32.totalorder %s245, 23
      %s249 = scalar_select %p248, %s245, 23
      %s250 = smul.addr %s249, 3
      %s251 = smul.addr %s247, 72
      %s252 = sadd.s32 %s250, %s251
      %s253 = smul.addr %s252, 8
      %s254 = scalar_lea.vmem %s1, %s253
      %p255 = pneg %p82
      %p256 = pneg %p79
      %p257 = pneg %p103
      %p258 = pneg %p100
      %p259 = pneg %p124
      %p260 = pneg %p121
      %p261 = pneg %p152
      %p262 = pneg %p149
      %p263 = scmp.lt.s32.totalorder %s19, 1
      %s264 = scalar_select %p263, %s19, 1
      %p265 = scmp.lt.s32.totalorder %s20, 0
      %s266 = scalar_select %p265, %s20, 0
      %s267 = smul.addr %s266, 32
      %s268 = smul.addr %s264, 32
      %s269 = sadd.s32 %s267, %s268
      %s270 = smul.addr %s269, 8
      %s271 = scalar_lea.vmem %s4, %s270
      %s272 = smul.u32 16, %s20
      %s273 = ssub.s32 24, %s272
      %p274 = scmp.lt.s32.totalorder %s273, 16
      %s275 = scalar_select %p274, %s273, 16
      %s276 = smul.u32 8, %s275
      %s277 = smul.u32 %s276, 3
      %p278 = scmp.lt.s32.totalorder %s19, 1
      %s279 = scalar_select %p278, %s19, 1
      %p280 = scmp.lt.s32.totalorder %s272, 23
      %s281 = scalar_select %p280, %s272, 23
      %s282 = smul.addr %s281, 3
      %s283 = smul.addr %s279, 72
      %s284 = sadd.s32 %s282, %s283
      %s285 = smul.addr %s284, 8
      %s286 = scalar_lea.vmem %s0, %s285
      %s287 = smul.u32 16, %s20
      %s288 = ssub.s32 24, %s287
      %p289 = scmp.lt.s32.totalorder %s288, 16
      %s290 = scalar_select %p289, %s288, 16
      %s291 = smul.u32 8, %s290
      %s292 = smul.u32 %s291, 3
      %s293 = sadd.s32 %s20, 1
      %s294 = smul.u32 %s293, 2
      %s295 = smul.u32 8, %s294
      %p296 = scmp.lt.s32.totalorder %s19, 1
      %s297 = scalar_select %p296, %s19, 1
      %p298 = scmp.lt.s32.totalorder %s295, 23
      %s299 = scalar_select %p298, %s295, 23
      %s300 = smul.addr %s299, 3
      %s301 = smul.addr %s297, 72
      %s302 = sadd.s32 %s300, %s301
      %s303 = smul.addr %s302, 8
      %s304 = scalar_lea.vmem %s1, %s303
      %s305 = sadd.s32 %s20, 1
      %s306 = smul.u32 %s305, 2
      %s307 = smul.u32 8, %s306
      %p308 = scmp.lt.s32.totalorder %s19, 1
      %s309 = scalar_select %p308, %s19, 1
      %p310 = scmp.lt.s32.totalorder %s20, 0
      %s311 = scalar_select %p310, %s20, 0
      %s312 = smul.addr %s311, 32
      %s313 = smul.addr %s309, 32
      %s314 = sadd.s32 %s312, %s313
      %s315 = smul.addr %s314, 8
      %s316 = scalar_lea.vmem %s4, %s315
      %v317 = vld [vmem:[%s286] sm:$0xff]
      %v318 = vld [vmem:[%s286 + $0x8] sm:$0xff]
      %v319 = vld [vmem:[%s286 + $0x10] sm:$0x3]
      %v320 = vld [vmem:[%s286 + $0x18] sm:$0xff]
      %v321 = vld [vmem:[%s286 + $0x20] sm:$0xff]
      %v322 = vld [vmem:[%s286 + $0x28] sm:$0x3]
      %v323 = vld [vmem:[%s286 + $0x30] sm:$0xff]
      %v324 = vld [vmem:[%s286 + $0x38] sm:$0xff]
      %v325 = vld [vmem:[%s286 + $0x40] sm:$0x3]
      %v326 = vld [vmem:[%s286 + $0x48] sm:$0xff]
      %v327 = vld [vmem:[%s286 + $0x50] sm:$0xff]
      %v328 = vld [vmem:[%s286 + $0x58] sm:$0x3]
      %v329 = vld [vmem:[%s286 + $0x60] sm:$0xff]
      %v330 = vld [vmem:[%s286 + $0x68] sm:$0xff]
      %v331 = vld [vmem:[%s286 + $0x70] sm:$0x3]
      %v332 = vld [vmem:[%s286 + $0x78] sm:$0xff]
      %v333 = vld [vmem:[%s286 + $0x80] sm:$0xff]
      %v334 = vld [vmem:[%s286 + $0x88] sm:$0x3]
      %v335 = vld [vmem:[%s286 + $0x90] sm:$0xff]
      %v336 = vld [vmem:[%s286 + $0x98] sm:$0xff]
      %v337 = vld [vmem:[%s286 + $0xa0] sm:$0x3]
      %v338 = vld [vmem:[%s286 + $0xa8] sm:$0xff]
      %v339 = vld [vmem:[%s286 + $0xb0] sm:$0xff]
      %v340 = vld [vmem:[%s286 + $0xb8] sm:$0x3]
      %v341 = vld [vmem:[%s286 + $0xc0] sm:$0xff]
      %v342 = vld [vmem:[%s286 + $0xc8] sm:$0xff]
      %v343 = vld [vmem:[%s286 + $0xd0] sm:$0x3]
      %v344 = vld [vmem:[%s286 + $0xd8] sm:$0xff]
      %v345 = vld [vmem:[%s286 + $0xe0] sm:$0xff]
      %v346 = vld [vmem:[%s286 + $0xe8] sm:$0x3]
      %v347 = vld [vmem:[%s286 + $0xf0] sm:$0xff]
      %v348 = vld [vmem:[%s286 + $0xf8] sm:$0xff]
      %v349 = vld [vmem:[%s286 + $0x100] sm:$0x3]
      %v350 = vld [vmem:[%s286 + $0x108] sm:$0xff]
      %v351 = vld [vmem:[%s286 + $0x110] sm:$0xff]
      %v352 = vld [vmem:[%s286 + $0x118] sm:$0x3]
      %v353 = vld [vmem:[%s286 + $0x120] sm:$0xff]
      %v354 = vld [vmem:[%s286 + $0x128] sm:$0xff]
      %v355 = vld [vmem:[%s286 + $0x130] sm:$0x3]
      %v356 = vld [vmem:[%s286 + $0x138] sm:$0xff]
      %v357 = vld [vmem:[%s286 + $0x140] sm:$0xff]
      %v358 = vld [vmem:[%s286 + $0x148] sm:$0x3]
      %v359 = vld [vmem:[%s286 + $0x150] sm:$0xff]
      %v360 = vld [vmem:[%s286 + $0x158] sm:$0xff]
      %v361 = vld [vmem:[%s286 + $0x160] sm:$0x3]
      %v362 = vld [vmem:[%s286 + $0x168] sm:$0xff]
      %v363 = vld [vmem:[%s286 + $0x170] sm:$0xff]
      %v364 = vld [vmem:[%s286 + $0x178] sm:$0x3]
      %v365 = vld [vmem:[%s304] sm:$0xff]
      %v366 = vld [vmem:[%s304 + $0x8] sm:$0xff]
      %v367 = vld [vmem:[%s304 + $0x10] sm:$0x3]
      %v368 = vld [vmem:[%s304 + $0x18] sm:$0xff]
      %v369 = vld [vmem:[%s304 + $0x20] sm:$0xff]
      %v370 = vld [vmem:[%s304 + $0x28] sm:$0x3]
      %vm371 = vcmask 31744
      %372 = vst.msk [vmem:[#allocation2] sm:$0xff] %vm371, %v317
      %373 = vst.msk [vmem:[#allocation2 + $0x8] sm:$0xff] %vm371, %v318
      %374 = vst.msk [vmem:[#allocation2 + $0x10] sm:$0xff] %vm371, %v320
      %375 = vst.msk [vmem:[#allocation2 + $0x18] sm:$0xff] %vm371, %v321
      %376 = vst.msk [vmem:[#allocation2 + $0x20] sm:$0xff] %vm371, %v323
      %377 = vst.msk [vmem:[#allocation2 + $0x28] sm:$0xff] %vm371, %v324
      %378 = vst.msk [vmem:[#allocation2 + $0x30] sm:$0xff] %vm371, %v326
      %379 = vst.msk [vmem:[#allocation2 + $0x38] sm:$0xff] %vm371, %v327
      %380 = vst.msk [vmem:[#allocation2 + $0x40] sm:$0xff] %vm371, %v329
      %381 = vst.msk [vmem:[#allocation2 + $0x48] sm:$0xff] %vm371, %v330
      %382 = vst.msk [vmem:[#allocation2 + $0x50] sm:$0xff] %vm371, %v332
      %383 = vst.msk [vmem:[#allocation2 + $0x58] sm:$0xff] %vm371, %v333
      %384 = vst.msk [vmem:[#allocation2 + $0x60] sm:$0xff] %vm371, %v335
      %385 = vst.msk [vmem:[#allocation2 + $0x68] sm:$0xff] %vm371, %v336
      %386 = vst.msk [vmem:[#allocation2 + $0x70] sm:$0xff] %vm371, %v338
      %387 = vst.msk [vmem:[#allocation2 + $0x78] sm:$0xff] %vm371, %v339
      %388 = vst.msk [vmem:[#allocation2 + $0x80] sm:$0xff] %vm371, %v341
      %389 = vst.msk [vmem:[#allocation2 + $0x88] sm:$0xff] %vm371, %v342
      %390 = vst.msk [vmem:[#allocation2 + $0x90] sm:$0xff] %vm371, %v344
      %391 = vst.msk [vmem:[#allocation2 + $0x98] sm:$0xff] %vm371, %v345
      %392 = vst.msk [vmem:[#allocation2 + $0xa0] sm:$0xff] %vm371, %v347
      %393 = vst.msk [vmem:[#allocation2 + $0xa8] sm:$0xff] %vm371, %v348
      %394 = vst.msk [vmem:[#allocation2 + $0xb0] sm:$0xff] %vm371, %v350
      %395 = vst.msk [vmem:[#allocation2 + $0xb8] sm:$0xff] %vm371, %v351
      %396 = vst.msk [vmem:[#allocation2 + $0xc0] sm:$0xff] %vm371, %v353
      %397 = vst.msk [vmem:[#allocation2 + $0xc8] sm:$0xff] %vm371, %v354
      %398 = vst.msk [vmem:[#allocation2 + $0xd0] sm:$0xff] %vm371, %v356
      %399 = vst.msk [vmem:[#allocation2 + $0xd8] sm:$0xff] %vm371, %v357
      %400 = vst.msk [vmem:[#allocation2 + $0xe0] sm:$0xff] %vm371, %v359
      %401 = vst.msk [vmem:[#allocation2 + $0xe8] sm:$0xff] %vm371, %v360
      %402 = vst.msk [vmem:[#allocation2 + $0xf0] sm:$0xff] %vm371, %v362
      %403 = vst.msk [vmem:[#allocation2 + $0xf8] sm:$0xff] %vm371, %v363
      %vm452 = vcmask 1046528
      %v453 = vrot.slane %v317, 1
      %v454 = vrot.slane %v318, 1
      %v455 = vsel %vm452, %v453, %v454
      %v456 = vrot.slane %v319, 1
      %v457 = vsel %vm452, %v454, %v456
      %v458 = vrot.slane %v320, 1
      %v459 = vrot.slane %v321, 1
      %v460 = vsel %vm452, %v458, %v459
      %v461 = vrot.slane %v322, 1
      %v462 = vsel %vm452, %v459, %v461
      %v463 = vrot.slane %v323, 1
      %v464 = vrot.slane %v324, 1
      %v465 = vsel %vm452, %v463, %v464
      %v466 = vrot.slane %v325, 1
      %v467 = vsel %vm452, %v464, %v466
      %v468 = vrot.slane %v326, 1
      %v469 = vrot.slane %v327, 1
      %v470 = vsel %vm452, %v468, %v469
      %v471 = vrot.slane %v328, 1
      %v472 = vsel %vm452, %v469, %v471
      %v473 = vrot.slane %v329, 1
      %v474 = vrot.slane %v330, 1
      %v475 = vsel %vm452, %v473, %v474
      %v476 = vrot.slane %v331, 1
      %v477 = vsel %vm452, %v474, %v476
      %v478 = vrot.slane %v332, 1
      %v479 = vrot.slane %v333, 1
      %v480 = vsel %vm452, %v478, %v479
      %v481 = vrot.slane %v334, 1
      %v482 = vsel %vm452, %v479, %v481
      %v483 = vrot.slane %v335, 1
      %v484 = vrot.slane %v336, 1
      %v485 = vsel %vm452, %v483, %v484
      %v486 = vrot.slane %v337, 1
      %v487 = vsel %vm452, %v484, %v486
      %v488 = vrot.slane %v338, 1
      %v489 = vrot.slane %v339, 1
      %v490 = vsel %vm452, %v488, %v489
      %v491 = vrot.slane %v340, 1
      %v492 = vsel %vm452, %v489, %v491
      %v493 = vrot.slane %v341, 1
      %v494 = vrot.slane %v342, 1
      %v495 = vsel %vm452, %v493, %v494
      %v496 = vrot.slane %v343, 1
      %v497 = vsel %vm452, %v494, %v496
      %v498 = vrot.slane %v344, 1
      %v499 = vrot.slane %v345, 1
      %v500 = vsel %vm452, %v498, %v499
      %v501 = vrot.slane %v346, 1
      %v502 = vsel %vm452, %v499, %v501
      %v503 = vrot.slane %v347, 1
      %v504 = vrot.slane %v348, 1
      %v505 = vsel %vm452, %v503, %v504
      %v506 = vrot.slane %v349, 1
      %v507 = vsel %vm452, %v504, %v506
      %v508 = vrot.slane %v350, 1
      %v509 = vrot.slane %v351, 1
      %v510 = vsel %vm452, %v508, %v509
      %v511 = vrot.slane %v352, 1
      %v512 = vsel %vm452, %v509, %v511
      %v513 = vrot.slane %v353, 1
      %v514 = vrot.slane %v354, 1
      %v515 = vsel %vm452, %v513, %v514
      %v516 = vrot.slane %v355, 1
      %v517 = vsel %vm452, %v514, %v516
      %v518 = vrot.slane %v356, 1
      %v519 = vrot.slane %v357, 1
      %v520 = vsel %vm452, %v518, %v519
      %v521 = vrot.slane %v358, 1
      %v522 = vsel %vm452, %v519, %v521
      %v523 = vrot.slane %v359, 1
      %v524 = vrot.slane %v360, 1
      %v525 = vsel %vm452, %v523, %v524
      %v526 = vrot.slane %v361, 1
      %v527 = vsel %vm452, %v524, %v526
      %v528 = vrot.slane %v362, 1
      %v529 = vrot.slane %v363, 1
      %v530 = vsel %vm452, %v528, %v529
      %v531 = vrot.slane %v364, 1
      %v532 = vsel %vm452, %v529, %v531
      %533 = vrot.lane.b32.xlu0 %v455, 4
      %v534 = vpop.permute.xlu0 %533
      %535 = vrot.lane.b32.xlu0 %v457, 4
      %v536 = vpop.permute.xlu0 %535
      %537 = vrot.lane.b32.xlu0 %v460, 4
      %v538 = vpop.permute.xlu0 %537
      %539 = vrot.lane.b32.xlu0 %v462, 4
      %v540 = vpop.permute.xlu0 %539
      %541 = vrot.lane.b32.xlu0 %v465, 4
      %v542 = vpop.permute.xlu0 %541
      %543 = vrot.lane.b32.xlu0 %v467, 4
      %v544 = vpop.permute.xlu0 %543
      %545 = vrot.lane.b32.xlu0 %v470, 4
      %v546 = vpop.permute.xlu0 %545
      %547 = vrot.lane.b32.xlu0 %v472, 4
      %v548 = vpop.permute.xlu0 %547
      %549 = vrot.lane.b32.xlu0 %v475, 4
      %v550 = vpop.permute.xlu0 %549
      %551 = vrot.lane.b32.xlu0 %v477, 4
      %v552 = vpop.permute.xlu0 %551
      %553 = vrot.lane.b32.xlu0 %v480, 4
      %v554 = vpop.permute.xlu0 %553
      %555 = vrot.lane.b32.xlu0 %v482, 4
      %v556 = vpop.permute.xlu0 %555
      %557 = vrot.lane.b32.xlu0 %v485, 4
      %v558 = vpop.permute.xlu0 %557
      %559 = vrot.lane.b32.xlu0 %v487, 4
      %v560 = vpop.permute.xlu0 %559
      %561 = vrot.lane.b32.xlu0 %v490, 4
      %v562 = vpop.permute.xlu0 %561
      %563 = vrot.lane.b32.xlu0 %v492, 4
      %v564 = vpop.permute.xlu0 %563
      %565 = vrot.lane.b32.xlu0 %v495, 4
      %v566 = vpop.permute.xlu0 %565
      %567 = vrot.lane.b32.xlu0 %v497, 4
      %v568 = vpop.permute.xlu0 %567
      %569 = vrot.lane.b32.xlu0 %v500, 4
      %v570 = vpop.permute.xlu0 %569
      %571 = vrot.lane.b32.xlu0 %v502, 4
      %v572 = vpop.permute.xlu0 %571
      %573 = vrot.lane.b32.xlu0 %v505, 4
      %v574 = vpop.permute.xlu0 %573
      %575 = vrot.lane.b32.xlu0 %v507, 4
      %v576 = vpop.permute.xlu0 %575
      %577 = vrot.lane.b32.xlu0 %v510, 4
      %v578 = vpop.permute.xlu0 %577
      %579 = vrot.lane.b32.xlu0 %v512, 4
      %v580 = vpop.permute.xlu0 %579
      %581 = vrot.lane.b32.xlu0 %v515, 4
      %v582 = vpop.permute.xlu0 %581
      %583 = vrot.lane.b32.xlu0 %v517, 4
      %v584 = vpop.permute.xlu0 %583
      %585 = vrot.lane.b32.xlu0 %v520, 4
      %v586 = vpop.permute.xlu0 %585
      %587 = vrot.lane.b32.xlu0 %v522, 4
      %v588 = vpop.permute.xlu0 %587
      %589 = vrot.lane.b32.xlu0 %v525, 4
      %v590 = vpop.permute.xlu0 %589
      %591 = vrot.lane.b32.xlu0 %v527, 4
      %v592 = vpop.permute.xlu0 %591
      %593 = vrot.lane.b32.xlu0 %v530, 4
      %v594 = vpop.permute.xlu0 %593
      %595 = vrot.lane.b32.xlu0 %v532, 4
      %v596 = vpop.permute.xlu0 %595
      %vm629 = vcmask 64544
      %630 = vst.msk [vmem:[#allocation2] sm:$0xff] %vm629, %v534
      %631 = vst.msk [vmem:[#allocation2 + $0x8] sm:$0xff] %vm629, %v536
      %632 = vst.msk [vmem:[#allocation2 + $0x10] sm:$0xff] %vm629, %v538
      %633 = vst.msk [vmem:[#allocation2 + $0x18] sm:$0xff] %vm629, %v540
      %634 = vst.msk [vmem:[#allocation2 + $0x20] sm:$0xff] %vm629, %v542
      %635 = vst.msk [vmem:[#allocation2 + $0x28] sm:$0xff] %vm629, %v544
      %636 = vst.msk [vmem:[#allocation2 + $0x30] sm:$0xff] %vm629, %v546
      %637 = vst.msk [vmem:[#allocation2 + $0x38] sm:$0xff] %vm629, %v548
      %638 = vst.msk [vmem:[#allocation2 + $0x40] sm:$0xff] %vm629, %v550
      %639 = vst.msk [vmem:[#allocation2 + $0x48] sm:$0xff] %vm629, %v552
      %640 = vst.msk [vmem:[#allocation2 + $0x50] sm:$0xff] %vm629, %v554
      %641 = vst.msk [vmem:[#allocation2 + $0x58] sm:$0xff] %vm629, %v556
      %642 = vst.msk [vmem:[#allocation2 + $0x60] sm:$0xff] %vm629, %v558
      %643 = vst.msk [vmem:[#allocation2 + $0x68] sm:$0xff] %vm629, %v560
      %644 = vst.msk [vmem:[#allocation2 + $0x70] sm:$0xff] %vm629, %v562
      %645 = vst.msk [vmem:[#allocation2 + $0x78] sm:$0xff] %vm629, %v564
      %646 = vst.msk [vmem:[#allocation2 + $0x80] sm:$0xff] %vm629, %v566
      %647 = vst.msk [vmem:[#allocation2 + $0x88] sm:$0xff] %vm629, %v568
      %648 = vst.msk [vmem:[#allocation2 + $0x90] sm:$0xff] %vm629, %v570
      %649 = vst.msk [vmem:[#allocation2 + $0x98] sm:$0xff] %vm629, %v572
      %650 = vst.msk [vmem:[#allocation2 + $0xa0] sm:$0xff] %vm629, %v574
      %651 = vst.msk [vmem:[#allocation2 + $0xa8] sm:$0xff] %vm629, %v576
      %652 = vst.msk [vmem:[#allocation2 + $0xb0] sm:$0xff] %vm629, %v578
      %653 = vst.msk [vmem:[#allocation2 + $0xb8] sm:$0xff] %vm629, %v580
      %654 = vst.msk [vmem:[#allocation2 + $0xc0] sm:$0xff] %vm629, %v582
      %655 = vst.msk [vmem:[#allocation2 + $0xc8] sm:$0xff] %vm629, %v584
      %656 = vst.msk [vmem:[#allocation2 + $0xd0] sm:$0xff] %vm629, %v586
      %657 = vst.msk [vmem:[#allocation2 + $0xd8] sm:$0xff] %vm629, %v588
      %658 = vst.msk [vmem:[#allocation2 + $0xe0] sm:$0xff] %vm629, %v590
      %659 = vst.msk [vmem:[#allocation2 + $0xe8] sm:$0xff] %vm629, %v592
      %660 = vst.msk [vmem:[#allocation2 + $0xf0] sm:$0xff] %vm629, %v594
      %661 = vst.msk [vmem:[#allocation2 + $0xf8] sm:$0xff] %vm629, %v596
      %vm662 = vcmask 1045504
      %v663 = vrot.slane %v317, 2
      %v664 = vrot.slane %v318, 2
      %v665 = vsel %vm662, %v663, %v664
      %v666 = vrot.slane %v319, 2
      %v667 = vsel %vm662, %v664, %v666
      %v668 = vrot.slane %v320, 2
      %v669 = vrot.slane %v321, 2
      %v670 = vsel %vm662, %v668, %v669
      %v671 = vrot.slane %v322, 2
      %v672 = vsel %vm662, %v669, %v671
      %v673 = vrot.slane %v323, 2
      %v674 = vrot.slane %v324, 2
      %v675 = vsel %vm662, %v673, %v674
      %v676 = vrot.slane %v325, 2
      %v677 = vsel %vm662, %v674, %v676
      %v678 = vrot.slane %v326, 2
      %v679 = vrot.slane %v327, 2
      %v680 = vsel %vm662, %v678, %v679
      %v681 = vrot.slane %v328, 2
      %v682 = vsel %vm662, %v679, %v681
      %v683 = vrot.slane %v329, 2
      %v684 = vrot.slane %v330, 2
      %v685 = vsel %vm662, %v683, %v684
      %v686 = vrot.slane %v331, 2
      %v687 = vsel %vm662, %v684, %v686
      %v688 = vrot.slane %v332, 2
      %v689 = vrot.slane %v333, 2
      %v690 = vsel %vm662, %v688, %v689
      %v691 = vrot.slane %v334, 2
      %v692 = vsel %vm662, %v689, %v691
      %v693 = vrot.slane %v335, 2
      %v694 = vrot.slane %v336, 2
      %v695 = vsel %vm662, %v693, %v694
      %v696 = vrot.slane %v337, 2
      %v697 = vsel %vm662, %v694, %v696
      %v698 = vrot.slane %v338, 2
      %v699 = vrot.slane %v339, 2
      %v700 = vsel %vm662, %v698, %v699
      %v701 = vrot.slane %v340, 2
      %v702 = vsel %vm662, %v699, %v701
      %v703 = vrot.slane %v341, 2
      %v704 = vrot.slane %v342, 2
      %v705 = vsel %vm662, %v703, %v704
      %v706 = vrot.slane %v343, 2
      %v707 = vsel %vm662, %v704, %v706
      %v708 = vrot.slane %v344, 2
      %v709 = vrot.slane %v345, 2
      %v710 = vsel %vm662, %v708, %v709
      %v711 = vrot.slane %v346, 2
      %v712 = vsel %vm662, %v709, %v711
      %v713 = vrot.slane %v347, 2
      %v714 = vrot.slane %v348, 2
      %v715 = vsel %vm662, %v713, %v714
      %v716 = vrot.slane %v349, 2
      %v717 = vsel %vm662, %v714, %v716
      %v718 = vrot.slane %v350, 2
      %v719 = vrot.slane %v351, 2
      %v720 = vsel %vm662, %v718, %v719
      %v721 = vrot.slane %v352, 2
      %v722 = vsel %vm662, %v719, %v721
      %v723 = vrot.slane %v353, 2
      %v724 = vrot.slane %v354, 2
      %v725 = vsel %vm662, %v723, %v724
      %v726 = vrot.slane %v355, 2
      %v727 = vsel %vm662, %v724, %v726
      %v728 = vrot.slane %v356, 2
      %v729 = vrot.slane %v357, 2
      %v730 = vsel %vm662, %v728, %v729
      %v731 = vrot.slane %v358, 2
      %v732 = vsel %vm662, %v729, %v731
      %v733 = vrot.slane %v359, 2
      %v734 = vrot.slane %v360, 2
      %v735 = vsel %vm662, %v733, %v734
      %v736 = vrot.slane %v361, 2
      %v737 = vsel %vm662, %v734, %v736
      %v738 = vrot.slane %v362, 2
      %v739 = vrot.slane %v363, 2
      %v740 = vsel %vm662, %v738, %v739
      %v741 = vrot.slane %v364, 2
      %v742 = vsel %vm662, %v739, %v741
      %743 = vrot.lane.b32.xlu0 %v665, 8
      %v744 = vpop.permute.xlu0 %743
      %745 = vrot.lane.b32.xlu0 %v667, 8
      %v746 = vpop.permute.xlu0 %745
      %747 = vrot.lane.b32.xlu0 %v670, 8
      %v748 = vpop.permute.xlu0 %747
      %749 = vrot.lane.b32.xlu0 %v672, 8
      %v750 = vpop.permute.xlu0 %749
      %751 = vrot.lane.b32.xlu0 %v675, 8
      %v752 = vpop.permute.xlu0 %751
      %753 = vrot.lane.b32.xlu0 %v677, 8
      %v754 = vpop.permute.xlu0 %753
      %755 = vrot.lane.b32.xlu0 %v680, 8
      %v756 = vpop.permute.xlu0 %755
      %757 = vrot.lane.b32.xlu0 %v682, 8
      %v758 = vpop.permute.xlu0 %757
      %759 = vrot.lane.b32.xlu0 %v685, 8
      %v760 = vpop.permute.xlu0 %759
      %761 = vrot.lane.b32.xlu0 %v687, 8
      %v762 = vpop.permute.xlu0 %761
      %763 = vrot.lane.b32.xlu0 %v690, 8
      %v764 = vpop.permute.xlu0 %763
      %765 = vrot.lane.b32.xlu0 %v692, 8
      %v766 = vpop.permute.xlu0 %765
      %767 = vrot.lane.b32.xlu0 %v695, 8
      %v768 = vpop.permute.xlu0 %767
      %769 = vrot.lane.b32.xlu0 %v697, 8
      %v770 = vpop.permute.xlu0 %769
      %771 = vrot.lane.b32.xlu0 %v700, 8
      %v772 = vpop.permute.xlu0 %771
      %773 = vrot.lane.b32.xlu0 %v702, 8
      %v774 = vpop.permute.xlu0 %773
      %775 = vrot.lane.b32.xlu0 %v705, 8
      %v776 = vpop.permute.xlu0 %775
      %777 = vrot.lane.b32.xlu0 %v707, 8
      %v778 = vpop.permute.xlu0 %777
      %779 = vrot.lane.b32.xlu0 %v710, 8
      %v780 = vpop.permute.xlu0 %779
      %781 = vrot.lane.b32.xlu0 %v712, 8
      %v782 = vpop.permute.xlu0 %781
      %783 = vrot.lane.b32.xlu0 %v715, 8
      %v784 = vpop.permute.xlu0 %783
      %785 = vrot.lane.b32.xlu0 %v717, 8
      %v786 = vpop.permute.xlu0 %785
      %787 = vrot.lane.b32.xlu0 %v720, 8
      %v788 = vpop.permute.xlu0 %787
      %789 = vrot.lane.b32.xlu0 %v722, 8
      %v790 = vpop.permute.xlu0 %789
      %791 = vrot.lane.b32.xlu0 %v725, 8
      %v792 = vpop.permute.xlu0 %791
      %793 = vrot.lane.b32.xlu0 %v727, 8
      %v794 = vpop.permute.xlu0 %793
      %795 = vrot.lane.b32.xlu0 %v730, 8
      %v796 = vpop.permute.xlu0 %795
      %797 = vrot.lane.b32.xlu0 %v732, 8
      %v798 = vpop.permute.xlu0 %797
      %799 = vrot.lane.b32.xlu0 %v735, 8
      %v800 = vpop.permute.xlu0 %799
      %801 = vrot.lane.b32.xlu0 %v737, 8
      %v802 = vpop.permute.xlu0 %801
      %803 = vrot.lane.b32.xlu0 %v740, 8
      %v804 = vpop.permute.xlu0 %803
      %805 = vrot.lane.b32.xlu0 %v742, 8
      %v806 = vpop.permute.xlu0 %805
      %vm839 = vcmask 97344
      %840 = vst.msk [vmem:[#allocation2] sm:$0xff] %vm839, %v744
      %841 = vst.msk [vmem:[#allocation2 + $0x8] sm:$0xff] %vm839, %v746
      %842 = vst.msk [vmem:[#allocation2 + $0x10] sm:$0xff] %vm839, %v748
      %843 = vst.msk [vmem:[#allocation2 + $0x18] sm:$0xff] %vm839, %v750
      %844 = vst.msk [vmem:[#allocation2 + $0x20] sm:$0xff] %vm839, %v752
      %845 = vst.msk [vmem:[#allocation2 + $0x28] sm:$0xff] %vm839, %v754
      %846 = vst.msk [vmem:[#allocation2 + $0x30] sm:$0xff] %vm839, %v756
      %847 = vst.msk [vmem:[#allocation2 + $0x38] sm:$0xff] %vm839, %v758
      %848 = vst.msk [vmem:[#allocation2 + $0x40] sm:$0xff] %vm839, %v760
      %849 = vst.msk [vmem:[#allocation2 + $0x48] sm:$0xff] %vm839, %v762
      %850 = vst.msk [vmem:[#allocation2 + $0x50] sm:$0xff] %vm839, %v764
      %851 = vst.msk [vmem:[#allocation2 + $0x58] sm:$0xff] %vm839, %v766
      %852 = vst.msk [vmem:[#allocation2 + $0x60] sm:$0xff] %vm839, %v768
      %853 = vst.msk [vmem:[#allocation2 + $0x68] sm:$0xff] %vm839, %v770
      %854 = vst.msk [vmem:[#allocation2 + $0x70] sm:$0xff] %vm839, %v772
      %855 = vst.msk [vmem:[#allocation2 + $0x78] sm:$0xff] %vm839, %v774
      %856 = vst.msk [vmem:[#allocation2 + $0x80] sm:$0xff] %vm839, %v776
      %857 = vst.msk [vmem:[#allocation2 + $0x88] sm:$0xff] %vm839, %v778
      %858 = vst.msk [vmem:[#allocation2 + $0x90] sm:$0xff] %vm839, %v780
      %859 = vst.msk [vmem:[#allocation2 + $0x98] sm:$0xff] %vm839, %v782
      %860 = vst.msk [vmem:[#allocation2 + $0xa0] sm:$0xff] %vm839, %v784
      %861 = vst.msk [vmem:[#allocation2 + $0xa8] sm:$0xff] %vm839, %v786
      %862 = vst.msk [vmem:[#allocation2 + $0xb0] sm:$0xff] %vm839, %v788
      %863 = vst.msk [vmem:[#allocation2 + $0xb8] sm:$0xff] %vm839, %v790
      %864 = vst.msk [vmem:[#allocation2 + $0xc0] sm:$0xff] %vm839, %v792
      %865 = vst.msk [vmem:[#allocation2 + $0xc8] sm:$0xff] %vm839, %v794
      %866 = vst.msk [vmem:[#allocation2 + $0xd0] sm:$0xff] %vm839, %v796
      %867 = vst.msk [vmem:[#allocation2 + $0xd8] sm:$0xff] %vm839, %v798
      %868 = vst.msk [vmem:[#allocation2 + $0xe0] sm:$0xff] %vm839, %v800
      %869 = vst.msk [vmem:[#allocation2 + $0xe8] sm:$0xff] %vm839, %v802
      %870 = vst.msk [vmem:[#allocation2 + $0xf0] sm:$0xff] %vm839, %v804
      %871 = vst.msk [vmem:[#allocation2 + $0xf8] sm:$0xff] %vm839, %v806
      %874 = vrot.lane.b32.xlu0 %v320, 12
      %v875 = vpop.permute.xlu0 %874
      %876 = vrot.lane.b32.xlu0 %v321, 12
      %v877 = vpop.permute.xlu0 %876
      %878 = vrot.lane.b32.xlu0 %v323, 12
      %v879 = vpop.permute.xlu0 %878
      %880 = vrot.lane.b32.xlu0 %v324, 12
      %v881 = vpop.permute.xlu0 %880
      %882 = vrot.lane.b32.xlu0 %v326, 12
      %v883 = vpop.permute.xlu0 %882
      %884 = vrot.lane.b32.xlu0 %v327, 12
      %v885 = vpop.permute.xlu0 %884
      %886 = vrot.lane.b32.xlu0 %v329, 12
      %v887 = vpop.permute.xlu0 %886
      %888 = vrot.lane.b32.xlu0 %v330, 12
      %v889 = vpop.permute.xlu0 %888
      %890 = vrot.lane.b32.xlu0 %v332, 12
      %v891 = vpop.permute.xlu0 %890
      %892 = vrot.lane.b32.xlu0 %v333, 12
      %v893 = vpop.permute.xlu0 %892
      %894 = vrot.lane.b32.xlu0 %v335, 12
      %v895 = vpop.permute.xlu0 %894
      %896 = vrot.lane.b32.xlu0 %v336, 12
      %v897 = vpop.permute.xlu0 %896
      %898 = vrot.lane.b32.xlu0 %v338, 12
      %v899 = vpop.permute.xlu0 %898
      %900 = vrot.lane.b32.xlu0 %v339, 12
      %v901 = vpop.permute.xlu0 %900
      %902 = vrot.lane.b32.xlu0 %v341, 12
      %v903 = vpop.permute.xlu0 %902
      %904 = vrot.lane.b32.xlu0 %v342, 12
      %v905 = vpop.permute.xlu0 %904
      %906 = vrot.lane.b32.xlu0 %v344, 12
      %v907 = vpop.permute.xlu0 %906
      %908 = vrot.lane.b32.xlu0 %v345, 12
      %v909 = vpop.permute.xlu0 %908
      %910 = vrot.lane.b32.xlu0 %v347, 12
      %v911 = vpop.permute.xlu0 %910
      %912 = vrot.lane.b32.xlu0 %v348, 12
      %v913 = vpop.permute.xlu0 %912
      %914 = vrot.lane.b32.xlu0 %v350, 12
      %v915 = vpop.permute.xlu0 %914
      %916 = vrot.lane.b32.xlu0 %v351, 12
      %v917 = vpop.permute.xlu0 %916
      %918 = vrot.lane.b32.xlu0 %v353, 12
      %v919 = vpop.permute.xlu0 %918
      %920 = vrot.lane.b32.xlu0 %v354, 12
      %v921 = vpop.permute.xlu0 %920
      %922 = vrot.lane.b32.xlu0 %v356, 12
      %v923 = vpop.permute.xlu0 %922
      %924 = vrot.lane.b32.xlu0 %v357, 12
      %v925 = vpop.permute.xlu0 %924
      %926 = vrot.lane.b32.xlu0 %v359, 12
      %v927 = vpop.permute.xlu0 %926
      %928 = vrot.lane.b32.xlu0 %v360, 12
      %v929 = vpop.permute.xlu0 %928
      %930 = vrot.lane.b32.xlu0 %v362, 12
      %v931 = vpop.permute.xlu0 %930
      %932 = vrot.lane.b32.xlu0 %v363, 12
      %v933 = vpop.permute.xlu0 %932
      %934 = vrot.lane.b32.xlu0 %v365, 12
      %v935 = vpop.permute.xlu0 %934
      %936 = vrot.lane.b32.xlu0 %v366, 12
      %v937 = vpop.permute.xlu0 %936
      %vm970 = vcmask 130144
      %971 = vst.msk [vmem:[#allocation2] sm:$0xff] %vm970, %v875
      %972 = vst.msk [vmem:[#allocation2 + $0x8] sm:$0xff] %vm970, %v877
      %973 = vst.msk [vmem:[#allocation2 + $0x10] sm:$0xff] %vm970, %v879
      %974 = vst.msk [vmem:[#allocation2 + $0x18] sm:$0xff] %vm970, %v881
      %975 = vst.msk [vmem:[#allocation2 + $0x20] sm:$0xff] %vm970, %v883
      %976 = vst.msk [vmem:[#allocation2 + $0x28] sm:$0xff] %vm970, %v885
      %977 = vst.msk [vmem:[#allocation2 + $0x30] sm:$0xff] %vm970, %v887
      %978 = vst.msk [vmem:[#allocation2 + $0x38] sm:$0xff] %vm970, %v889
      %979 = vst.msk [vmem:[#allocation2 + $0x40] sm:$0xff] %vm970, %v891
      %980 = vst.msk [vmem:[#allocation2 + $0x48] sm:$0xff] %vm970, %v893
      %981 = vst.msk [vmem:[#allocation2 + $0x50] sm:$0xff] %vm970, %v895
      %982 = vst.msk [vmem:[#allocation2 + $0x58] sm:$0xff] %vm970, %v897
      %983 = vst.msk [vmem:[#allocation2 + $0x60] sm:$0xff] %vm970, %v899
      %984 = vst.msk [vmem:[#allocation2 + $0x68] sm:$0xff] %vm970, %v901
      %985 = vst.msk [vmem:[#allocation2 + $0x70] sm:$0xff] %vm970, %v903
      %986 = vst.msk [vmem:[#allocation2 + $0x78] sm:$0xff] %vm970, %v905
      %987 = vst.msk [vmem:[#allocation2 + $0x80] sm:$0xff] %vm970, %v907
      %988 = vst.msk [vmem:[#allocation2 + $0x88] sm:$0xff] %vm970, %v909
      %989 = vst.msk [vmem:[#allocation2 + $0x90] sm:$0xff] %vm970, %v911
      %990 = vst.msk [vmem:[#allocation2 + $0x98] sm:$0xff] %vm970, %v913
      %991 = vst.msk [vmem:[#allocation2 + $0xa0] sm:$0xff] %vm970, %v915
      %992 = vst.msk [vmem:[#allocation2 + $0xa8] sm:$0xff] %vm970, %v917
      %993 = vst.msk [vmem:[#allocation2 + $0xb0] sm:$0xff] %vm970, %v919
      %994 = vst.msk [vmem:[#allocation2 + $0xb8] sm:$0xff] %vm970, %v921
      %995 = vst.msk [vmem:[#allocation2 + $0xc0] sm:$0xff] %vm970, %v923
      %996 = vst.msk [vmem:[#allocation2 + $0xc8] sm:$0xff] %vm970, %v925
      %997 = vst.msk [vmem:[#allocation2 + $0xd0] sm:$0xff] %vm970, %v927
      %998 = vst.msk [vmem:[#allocation2 + $0xd8] sm:$0xff] %vm970, %v929
      %999 = vst.msk [vmem:[#allocation2 + $0xe0] sm:$0xff] %vm970, %v931
      %1000 = vst.msk [vmem:[#allocation2 + $0xe8] sm:$0xff] %vm970, %v933
      %1001 = vst.msk [vmem:[#allocation2 + $0xf0] sm:$0xff] %vm970, %v935
      %1002 = vst.msk [vmem:[#allocation2 + $0xf8] sm:$0xff] %vm970, %v937
      %v1004 = vrot.slane %v365, 1
      %v1005 = vrot.slane %v366, 1
      %v1006 = vsel %vm452, %v1004, %v1005
      %v1007 = vrot.slane %v367, 1
      %v1008 = vsel %vm452, %v1005, %v1007
      %1009 = vrot.lane.b32.xlu0 %v460, 16
      %v1010 = vpop.permute.xlu0 %1009
      %1011 = vrot.lane.b32.xlu0 %v462, 16
      %v1012 = vpop.permute.xlu0 %1011
      %1013 = vrot.lane.b32.xlu0 %v465, 16
      %v1014 = vpop.permute.xlu0 %1013
      %1015 = vrot.lane.b32.xlu0 %v467, 16
      %v1016 = vpop.permute.xlu0 %1015
      %1017 = vrot.lane.b32.xlu0 %v470, 16
      %v1018 = vpop.permute.xlu0 %1017
      %1019 = vrot.lane.b32.xlu0 %v472, 16
      %v1020 = vpop.permute.xlu0 %1019
      %1021 = vrot.lane.b32.xlu0 %v475, 16
      %v1022 = vpop.permute.xlu0 %1021
      %1023 = vrot.lane.b32.xlu0 %v477, 16
      %v1024 = vpop.permute.xlu0 %1023
      %1025 = vrot.lane.b32.xlu0 %v480, 16
      %v1026 = vpop.permute.xlu0 %1025
      %1027 = vrot.lane.b32.xlu0 %v482, 16
      %v1028 = vpop.permute.xlu0 %1027
      %1029 = vrot.lane.b32.xlu0 %v485, 16
      %v1030 = vpop.permute.xlu0 %1029
      %1031 = vrot.lane.b32.xlu0 %v487, 16
      %v1032 = vpop.permute.xlu0 %1031
      %1033 = vrot.lane.b32.xlu0 %v490, 16
      %v1034 = vpop.permute.xlu0 %1033
      %1035 = vrot.lane.b32.xlu0 %v492, 16
      %v1036 = vpop.permute.xlu0 %1035
      %1037 = vrot.lane.b32.xlu0 %v495, 16
      %v1038 = vpop.permute.xlu0 %1037
      %1039 = vrot.lane.b32.xlu0 %v497, 16
      %v1040 = vpop.permute.xlu0 %1039
      %1041 = vrot.lane.b32.xlu0 %v500, 16
      %v1042 = vpop.permute.xlu0 %1041
      %1043 = vrot.lane.b32.xlu0 %v502, 16
      %v1044 = vpop.permute.xlu0 %1043
      %1045 = vrot.lane.b32.xlu0 %v505, 16
      %v1046 = vpop.permute.xlu0 %1045
      %1047 = vrot.lane.b32.xlu0 %v507, 16
      %v1048 = vpop.permute.xlu0 %1047
      %1049 = vrot.lane.b32.xlu0 %v510, 16
      %v1050 = vpop.permute.xlu0 %1049
      %1051 = vrot.lane.b32.xlu0 %v512, 16
      %v1052 = vpop.permute.xlu0 %1051
      %1053 = vrot.lane.b32.xlu0 %v515, 16
      %v1054 = vpop.permute.xlu0 %1053
      %1055 = vrot.lane.b32.xlu0 %v517, 16
      %v1056 = vpop.permute.xlu0 %1055
      %1057 = vrot.lane.b32.xlu0 %v520, 16
      %v1058 = vpop.permute.xlu0 %1057
      %1059 = vrot.lane.b32.xlu0 %v522, 16
      %v1060 = vpop.permute.xlu0 %1059
      %1061 = vrot.lane.b32.xlu0 %v525, 16
      %v1062 = vpop.permute.xlu0 %1061
      %1063 = vrot.lane.b32.xlu0 %v527, 16
      %v1064 = vpop.permute.xlu0 %1063
      %1065 = vrot.lane.b32.xlu0 %v530, 16
      %v1066 = vpop.permute.xlu0 %1065
      %1067 = vrot.lane.b32.xlu0 %v532, 16
      %v1068 = vpop.permute.xlu0 %1067
      %1069 = vrot.lane.b32.xlu0 %v1006, 16
      %v1070 = vpop.permute.xlu0 %1069
      %1071 = vrot.lane.b32.xlu0 %v1008, 16
      %v1072 = vpop.permute.xlu0 %1071
      %vm1105 = vcmask 162944
      %1106 = vst.msk [vmem:[#allocation2] sm:$0xff] %vm1105, %v1010
      %1107 = vst.msk [vmem:[#allocation2 + $0x8] sm:$0xff] %vm1105, %v1012
      %1108 = vst.msk [vmem:[#allocation2 + $0x10] sm:$0xff] %vm1105, %v1014
      %1109 = vst.msk [vmem:[#allocation2 + $0x18] sm:$0xff] %vm1105, %v1016
      %1110 = vst.msk [vmem:[#allocation2 + $0x20] sm:$0xff] %vm1105, %v1018
      %1111 = vst.msk [vmem:[#allocation2 + $0x28] sm:$0xff] %vm1105, %v1020
      %1112 = vst.msk [vmem:[#allocation2 + $0x30] sm:$0xff] %vm1105, %v1022
      %1113 = vst.msk [vmem:[#allocation2 + $0x38] sm:$0xff] %vm1105, %v1024
      %1114 = vst.msk [vmem:[#allocation2 + $0x40] sm:$0xff] %vm1105, %v1026
      %1115 = vst.msk [vmem:[#allocation2 + $0x48] sm:$0xff] %vm1105, %v1028
      %1116 = vst.msk [vmem:[#allocation2 + $0x50] sm:$0xff] %vm1105, %v1030
      %1117 = vst.msk [vmem:[#allocation2 + $0x58] sm:$0xff] %vm1105, %v1032
      %1118 = vst.msk [vmem:[#allocation2 + $0x60] sm:$0xff] %vm1105, %v1034
      %1119 = vst.msk [vmem:[#allocation2 + $0x68] sm:$0xff] %vm1105, %v1036
      %1120 = vst.msk [vmem:[#allocation2 + $0x70] sm:$0xff] %vm1105, %v1038
      %1121 = vst.msk [vmem:[#allocation2 + $0x78] sm:$0xff] %vm1105, %v1040
      %1122 = vst.msk [vmem:[#allocation2 + $0x80] sm:$0xff] %vm1105, %v1042
      %1123 = vst.msk [vmem:[#allocation2 + $0x88] sm:$0xff] %vm1105, %v1044
      %1124 = vst.msk [vmem:[#allocation2 + $0x90] sm:$0xff] %vm1105, %v1046
      %1125 = vst.msk [vmem:[#allocation2 + $0x98] sm:$0xff] %vm1105, %v1048
      %1126 = vst.msk [vmem:[#allocation2 + $0xa0] sm:$0xff] %vm1105, %v1050
      %1127 = vst.msk [vmem:[#allocation2 + $0xa8] sm:$0xff] %vm1105, %v1052
      %1128 = vst.msk [vmem:[#allocation2 + $0xb0] sm:$0xff] %vm1105, %v1054
      %1129 = vst.msk [vmem:[#allocation2 + $0xb8] sm:$0xff] %vm1105, %v1056
      %1130 = vst.msk [vmem:[#allocation2 + $0xc0] sm:$0xff] %vm1105, %v1058
      %1131 = vst.msk [vmem:[#allocation2 + $0xc8] sm:$0xff] %vm1105, %v1060
      %1132 = vst.msk [vmem:[#allocation2 + $0xd0] sm:$0xff] %vm1105, %v1062
      %1133 = vst.msk [vmem:[#allocation2 + $0xd8] sm:$0xff] %vm1105, %v1064
      %1134 = vst.msk [vmem:[#allocation2 + $0xe0] sm:$0xff] %vm1105, %v1066
      %1135 = vst.msk [vmem:[#allocation2 + $0xe8] sm:$0xff] %vm1105, %v1068
      %1136 = vst.msk [vmem:[#allocation2 + $0xf0] sm:$0xff] %vm1105, %v1070
      %1137 = vst.msk [vmem:[#allocation2 + $0xf8] sm:$0xff] %vm1105, %v1072
      %v1138 = vrot.slane %v365, 2
      %v1139 = vrot.slane %v366, 2
      %v1140 = vsel %vm662, %v1138, %v1139
      %v1141 = vrot.slane %v367, 2
      %v1142 = vsel %vm662, %v1139, %v1141
      %1143 = vrot.lane.b32.xlu0 %v670, 20
      %v1144 = vpop.permute.xlu0 %1143
      %1145 = vrot.lane.b32.xlu0 %v672, 20
      %v1146 = vpop.permute.xlu0 %1145
      %1147 = vrot.lane.b32.xlu0 %v675, 20
      %v1148 = vpop.permute.xlu0 %1147
      %1149 = vrot.lane.b32.xlu0 %v677, 20
      %v1150 = vpop.permute.xlu0 %1149
      %1151 = vrot.lane.b32.xlu0 %v680, 20
      %v1152 = vpop.permute.xlu0 %1151
      %1153 = vrot.lane.b32.xlu0 %v682, 20
      %v1154 = vpop.permute.xlu0 %1153
      %1155 = vrot.lane.b32.xlu0 %v685, 20
      %v1156 = vpop.permute.xlu0 %1155
      %1157 = vrot.lane.b32.xlu0 %v687, 20
      %v1158 = vpop.permute.xlu0 %1157
      %1159 = vrot.lane.b32.xlu0 %v690, 20
      %v1160 = vpop.permute.xlu0 %1159
      %1161 = vrot.lane.b32.xlu0 %v692, 20
      %v1162 = vpop.permute.xlu0 %1161
      %1163 = vrot.lane.b32.xlu0 %v695, 20
      %v1164 = vpop.permute.xlu0 %1163
      %1165 = vrot.lane.b32.xlu0 %v697, 20
      %v1166 = vpop.permute.xlu0 %1165
      %1167 = vrot.lane.b32.xlu0 %v700, 20
      %v1168 = vpop.permute.xlu0 %1167
      %1169 = vrot.lane.b32.xlu0 %v702, 20
      %v1170 = vpop.permute.xlu0 %1169
      %1171 = vrot.lane.b32.xlu0 %v705, 20
      %v1172 = vpop.permute.xlu0 %1171
      %1173 = vrot.lane.b32.xlu0 %v707, 20
      %v1174 = vpop.permute.xlu0 %1173
      %1175 = vrot.lane.b32.xlu0 %v710, 20
      %v1176 = vpop.permute.xlu0 %1175
      %1177 = vrot.lane.b32.xlu0 %v712, 20
      %v1178 = vpop.permute.xlu0 %1177
      %1179 = vrot.lane.b32.xlu0 %v715, 20
      %v1180 = vpop.permute.xlu0 %1179
      %1181 = vrot.lane.b32.xlu0 %v717, 20
      %v1182 = vpop.permute.xlu0 %1181
      %1183 = vrot.lane.b32.xlu0 %v720, 20
      %v1184 = vpop.permute.xlu0 %1183
      %1185 = vrot.lane.b32.xlu0 %v722, 20
      %v1186 = vpop.permute.xlu0 %1185
      %1187 = vrot.lane.b32.xlu0 %v725, 20
      %v1188 = vpop.permute.xlu0 %1187
      %1189 = vrot.lane.b32.xlu0 %v727, 20
      %v1190 = vpop.permute.xlu0 %1189
      %1191 = vrot.lane.b32.xlu0 %v730, 20
      %v1192 = vpop.permute.xlu0 %1191
      %1193 = vrot.lane.b32.xlu0 %v732, 20
      %v1194 = vpop.permute.xlu0 %1193
      %1195 = vrot.lane.b32.xlu0 %v735, 20
      %v1196 = vpop.permute.xlu0 %1195
      %1197 = vrot.lane.b32.xlu0 %v737, 20
      %v1198 = vpop.permute.xlu0 %1197
      %1199 = vrot.lane.b32.xlu0 %v740, 20
      %v1200 = vpop.permute.xlu0 %1199
      %1201 = vrot.lane.b32.xlu0 %v742, 20
      %v1202 = vpop.permute.xlu0 %1201
      %1203 = vrot.lane.b32.xlu0 %v1140, 20
      %v1204 = vpop.permute.xlu0 %1203
      %1205 = vrot.lane.b32.xlu0 %v1142, 20
      %v1206 = vpop.permute.xlu0 %1205
      %vm1239 = vcmask 195744
      %1240 = vst.msk [vmem:[#allocation2] sm:$0xff] %vm1239, %v1144
      %1241 = vst.msk [vmem:[#allocation2 + $0x8] sm:$0xff] %vm1239, %v1146
      %1242 = vst.msk [vmem:[#allocation2 + $0x10] sm:$0xff] %vm1239, %v1148
      %1243 = vst.msk [vmem:[#allocation2 + $0x18] sm:$0xff] %vm1239, %v1150
      %1244 = vst.msk [vmem:[#allocation2 + $0x20] sm:$0xff] %vm1239, %v1152
      %1245 = vst.msk [vmem:[#allocation2 + $0x28] sm:$0xff] %vm1239, %v1154
      %1246 = vst.msk [vmem:[#allocation2 + $0x30] sm:$0xff] %vm1239, %v1156
      %1247 = vst.msk [vmem:[#allocation2 + $0x38] sm:$0xff] %vm1239, %v1158
      %1248 = vst.msk [vmem:[#allocation2 + $0x40] sm:$0xff] %vm1239, %v1160
      %1249 = vst.msk [vmem:[#allocation2 + $0x48] sm:$0xff] %vm1239, %v1162
      %1250 = vst.msk [vmem:[#allocation2 + $0x50] sm:$0xff] %vm1239, %v1164
      %1251 = vst.msk [vmem:[#allocation2 + $0x58] sm:$0xff] %vm1239, %v1166
      %1252 = vst.msk [vmem:[#allocation2 + $0x60] sm:$0xff] %vm1239, %v1168
      %1253 = vst.msk [vmem:[#allocation2 + $0x68] sm:$0xff] %vm1239, %v1170
      %1254 = vst.msk [vmem:[#allocation2 + $0x70] sm:$0xff] %vm1239, %v1172
      %1255 = vst.msk [vmem:[#allocation2 + $0x78] sm:$0xff] %vm1239, %v1174
      %1256 = vst.msk [vmem:[#allocation2 + $0x80] sm:$0xff] %vm1239, %v1176
      %1257 = vst.msk [vmem:[#allocation2 + $0x88] sm:$0xff] %vm1239, %v1178
      %1258 = vst.msk [vmem:[#allocation2 + $0x90] sm:$0xff] %vm1239, %v1180
      %1259 = vst.msk [vmem:[#allocation2 + $0x98] sm:$0xff] %vm1239, %v1182
      %1260 = vst.msk [vmem:[#allocation2 + $0xa0] sm:$0xff] %vm1239, %v1184
      %1261 = vst.msk [vmem:[#allocation2 + $0xa8] sm:$0xff] %vm1239, %v1186
      %1262 = vst.msk [vmem:[#allocation2 + $0xb0] sm:$0xff] %vm1239, %v1188
      %1263 = vst.msk [vmem:[#allocation2 + $0xb8] sm:$0xff] %vm1239, %v1190
      %1264 = vst.msk [vmem:[#allocation2 + $0xc0] sm:$0xff] %vm1239, %v1192
      %1265 = vst.msk [vmem:[#allocation2 + $0xc8] sm:$0xff] %vm1239, %v1194
      %1266 = vst.msk [vmem:[#allocation2 + $0xd0] sm:$0xff] %vm1239, %v1196
      %1267 = vst.msk [vmem:[#allocation2 + $0xd8] sm:$0xff] %vm1239, %v1198
      %1268 = vst.msk [vmem:[#allocation2 + $0xe0] sm:$0xff] %vm1239, %v1200
      %1269 = vst.msk [vmem:[#allocation2 + $0xe8] sm:$0xff] %vm1239, %v1202
      %1270 = vst.msk [vmem:[#allocation2 + $0xf0] sm:$0xff] %vm1239, %v1204
      %1271 = vst.msk [vmem:[#allocation2 + $0xf8] sm:$0xff] %vm1239, %v1206
      %1274 = vrot.lane.b32.xlu0 %v323, 24
      %v1275 = vpop.permute.xlu0 %1274
      %1276 = vrot.lane.b32.xlu0 %v324, 24
      %v1277 = vpop.permute.xlu0 %1276
      %1278 = vrot.lane.b32.xlu0 %v326, 24
      %v1279 = vpop.permute.xlu0 %1278
      %1280 = vrot.lane.b32.xlu0 %v327, 24
      %v1281 = vpop.permute.xlu0 %1280
      %1282 = vrot.lane.b32.xlu0 %v329, 24
      %v1283 = vpop.permute.xlu0 %1282
      %1284 = vrot.lane.b32.xlu0 %v330, 24
      %v1285 = vpop.permute.xlu0 %1284
      %1286 = vrot.lane.b32.xlu0 %v332, 24
      %v1287 = vpop.permute.xlu0 %1286
      %1288 = vrot.lane.b32.xlu0 %v333, 24
      %v1289 = vpop.permute.xlu0 %1288
      %1290 = vrot.lane.b32.xlu0 %v335, 24
      %v1291 = vpop.permute.xlu0 %1290
      %1292 = vrot.lane.b32.xlu0 %v336, 24
      %v1293 = vpop.permute.xlu0 %1292
      %1294 = vrot.lane.b32.xlu0 %v338, 24
      %v1295 = vpop.permute.xlu0 %1294
      %1296 = vrot.lane.b32.xlu0 %v339, 24
      %v1297 = vpop.permute.xlu0 %1296
      %1298 = vrot.lane.b32.xlu0 %v341, 24
      %v1299 = vpop.permute.xlu0 %1298
      %1300 = vrot.lane.b32.xlu0 %v342, 24
      %v1301 = vpop.permute.xlu0 %1300
      %1302 = vrot.lane.b32.xlu0 %v344, 24
      %v1303 = vpop.permute.xlu0 %1302
      %1304 = vrot.lane.b32.xlu0 %v345, 24
      %v1305 = vpop.permute.xlu0 %1304
      %1306 = vrot.lane.b32.xlu0 %v347, 24
      %v1307 = vpop.permute.xlu0 %1306
      %1308 = vrot.lane.b32.xlu0 %v348, 24
      %v1309 = vpop.permute.xlu0 %1308
      %1310 = vrot.lane.b32.xlu0 %v350, 24
      %v1311 = vpop.permute.xlu0 %1310
      %1312 = vrot.lane.b32.xlu0 %v351, 24
      %v1313 = vpop.permute.xlu0 %1312
      %1314 = vrot.lane.b32.xlu0 %v353, 24
      %v1315 = vpop.permute.xlu0 %1314
      %1316 = vrot.lane.b32.xlu0 %v354, 24
      %v1317 = vpop.permute.xlu0 %1316
      %1318 = vrot.lane.b32.xlu0 %v356, 24
      %v1319 = vpop.permute.xlu0 %1318
      %1320 = vrot.lane.b32.xlu0 %v357, 24
      %v1321 = vpop.permute.xlu0 %1320
      %1322 = vrot.lane.b32.xlu0 %v359, 24
      %v1323 = vpop.permute.xlu0 %1322
      %1324 = vrot.lane.b32.xlu0 %v360, 24
      %v1325 = vpop.permute.xlu0 %1324
      %1326 = vrot.lane.b32.xlu0 %v362, 24
      %v1327 = vpop.permute.xlu0 %1326
      %1328 = vrot.lane.b32.xlu0 %v363, 24
      %v1329 = vpop.permute.xlu0 %1328
      %1330 = vrot.lane.b32.xlu0 %v365, 24
      %v1331 = vpop.permute.xlu0 %1330
      %1332 = vrot.lane.b32.xlu0 %v366, 24
      %v1333 = vpop.permute.xlu0 %1332
      %1334 = vrot.lane.b32.xlu0 %v368, 24
      %v1335 = vpop.permute.xlu0 %1334
      %1336 = vrot.lane.b32.xlu0 %v369, 24
      %v1337 = vpop.permute.xlu0 %1336
      %vm1370 = vcmask 228544
      %1371 = vst.msk [vmem:[#allocation2] sm:$0xff] %vm1370, %v1275
      %1372 = vst.msk [vmem:[#allocation2 + $0x8] sm:$0xff] %vm1370, %v1277
      %1373 = vst.msk [vmem:[#allocation2 + $0x10] sm:$0xff] %vm1370, %v1279
      %1374 = vst.msk [vmem:[#allocation2 + $0x18] sm:$0xff] %vm1370, %v1281
      %1375 = vst.msk [vmem:[#allocation2 + $0x20] sm:$0xff] %vm1370, %v1283
      %1376 = vst.msk [vmem:[#allocation2 + $0x28] sm:$0xff] %vm1370, %v1285
      %1377 = vst.msk [vmem:[#allocation2 + $0x30] sm:$0xff] %vm1370, %v1287
      %1378 = vst.msk [vmem:[#allocation2 + $0x38] sm:$0xff] %vm1370, %v1289
      %1379 = vst.msk [vmem:[#allocation2 + $0x40] sm:$0xff] %vm1370, %v1291
      %1380 = vst.msk [vmem:[#allocation2 + $0x48] sm:$0xff] %vm1370, %v1293
      %1381 = vst.msk [vmem:[#allocation2 + $0x50] sm:$0xff] %vm1370, %v1295
      %1382 = vst.msk [vmem:[#allocation2 + $0x58] sm:$0xff] %vm1370, %v1297
      %1383 = vst.msk [vmem:[#allocation2 + $0x60] sm:$0xff] %vm1370, %v1299
      %1384 = vst.msk [vmem:[#allocation2 + $0x68] sm:$0xff] %vm1370, %v1301
      %1385 = vst.msk [vmem:[#allocation2 + $0x70] sm:$0xff] %vm1370, %v1303
      %1386 = vst.msk [vmem:[#allocation2 + $0x78] sm:$0xff] %vm1370, %v1305
      %1387 = vst.msk [vmem:[#allocation2 + $0x80] sm:$0xff] %vm1370, %v1307
      %1388 = vst.msk [vmem:[#allocation2 + $0x88] sm:$0xff] %vm1370, %v1309
      %1389 = vst.msk [vmem:[#allocation2 + $0x90] sm:$0xff] %vm1370, %v1311
      %1390 = vst.msk [vmem:[#allocation2 + $0x98] sm:$0xff] %vm1370, %v1313
      %1391 = vst.msk [vmem:[#allocation2 + $0xa0] sm:$0xff] %vm1370, %v1315
      %1392 = vst.msk [vmem:[#allocation2 + $0xa8] sm:$0xff] %vm1370, %v1317
      %1393 = vst.msk [vmem:[#allocation2 + $0xb0] sm:$0xff] %vm1370, %v1319
      %1394 = vst.msk [vmem:[#allocation2 + $0xb8] sm:$0xff] %vm1370, %v1321
      %1395 = vst.msk [vmem:[#allocation2 + $0xc0] sm:$0xff] %vm1370, %v1323
      %1396 = vst.msk [vmem:[#allocation2 + $0xc8] sm:$0xff] %vm1370, %v1325
      %1397 = vst.msk [vmem:[#allocation2 + $0xd0] sm:$0xff] %vm1370, %v1327
      %1398 = vst.msk [vmem:[#allocation2 + $0xd8] sm:$0xff] %vm1370, %v1329
      %1399 = vst.msk [vmem:[#allocation2 + $0xe0] sm:$0xff] %vm1370, %v1331
      %1400 = vst.msk [vmem:[#allocation2 + $0xe8] sm:$0xff] %vm1370, %v1333
      %1401 = vst.msk [vmem:[#allocation2 + $0xf0] sm:$0xff] %vm1370, %v1335
      %1402 = vst.msk [vmem:[#allocation2 + $0xf8] sm:$0xff] %vm1370, %v1337
      %v1404 = vrot.slane %v368, 1
      %v1405 = vrot.slane %v369, 1
      %v1406 = vsel %vm452, %v1404, %v1405
      %v1407 = vrot.slane %v370, 1
      %v1408 = vsel %vm452, %v1405, %v1407
      %1409 = vrot.lane.b32.xlu0 %v465, 28
      %v1410 = vpop.permute.xlu0 %1409
      %1411 = vrot.lane.b32.xlu0 %v467, 28
      %v1412 = vpop.permute.xlu0 %1411
      %1413 = vrot.lane.b32.xlu0 %v470, 28
      %v1414 = vpop.permute.xlu0 %1413
      %1415 = vrot.lane.b32.xlu0 %v472, 28
      %v1416 = vpop.permute.xlu0 %1415
      %1417 = vrot.lane.b32.xlu0 %v475, 28
      %v1418 = vpop.permute.xlu0 %1417
      %1419 = vrot.lane.b32.xlu0 %v477, 28
      %v1420 = vpop.permute.xlu0 %1419
      %1421 = vrot.lane.b32.xlu0 %v480, 28
      %v1422 = vpop.permute.xlu0 %1421
      %1423 = vrot.lane.b32.xlu0 %v482, 28
      %v1424 = vpop.permute.xlu0 %1423
      %1425 = vrot.lane.b32.xlu0 %v485, 28
      %v1426 = vpop.permute.xlu0 %1425
      %1427 = vrot.lane.b32.xlu0 %v487, 28
      %v1428 = vpop.permute.xlu0 %1427
      %1429 = vrot.lane.b32.xlu0 %v490, 28
      %v1430 = vpop.permute.xlu0 %1429
      %1431 = vrot.lane.b32.xlu0 %v492, 28
      %v1432 = vpop.permute.xlu0 %1431
      %1433 = vrot.lane.b32.xlu0 %v495, 28
      %v1434 = vpop.permute.xlu0 %1433
      %1435 = vrot.lane.b32.xlu0 %v497, 28
      %v1436 = vpop.permute.xlu0 %1435
      %1437 = vrot.lane.b32.xlu0 %v500, 28
      %v1438 = vpop.permute.xlu0 %1437
      %1439 = vrot.lane.b32.xlu0 %v502, 28
      %v1440 = vpop.permute.xlu0 %1439
      %1441 = vrot.lane.b32.xlu0 %v505, 28
      %v1442 = vpop.permute.xlu0 %1441
      %1443 = vrot.lane.b32.xlu0 %v507, 28
      %v1444 = vpop.permute.xlu0 %1443
      %1445 = vrot.lane.b32.xlu0 %v510, 28
      %v1446 = vpop.permute.xlu0 %1445
      %1447 = vrot.lane.b32.xlu0 %v512, 28
      %v1448 = vpop.permute.xlu0 %1447
      %1449 = vrot.lane.b32.xlu0 %v515, 28
      %v1450 = vpop.permute.xlu0 %1449
      %1451 = vrot.lane.b32.xlu0 %v517, 28
      %v1452 = vpop.permute.xlu0 %1451
      %1453 = vrot.lane.b32.xlu0 %v520, 28
      %v1454 = vpop.permute.xlu0 %1453
      %1455 = vrot.lane.b32.xlu0 %v522, 28
      %v1456 = vpop.permute.xlu0 %1455
      %1457 = vrot.lane.b32.xlu0 %v525, 28
      %v1458 = vpop.permute.xlu0 %1457
      %1459 = vrot.lane.b32.xlu0 %v527, 28
      %v1460 = vpop.permute.xlu0 %1459
      %1461 = vrot.lane.b32.xlu0 %v530, 28
      %v1462 = vpop.permute.xlu0 %1461
      %1463 = vrot.lane.b32.xlu0 %v532, 28
      %v1464 = vpop.permute.xlu0 %1463
      %1465 = vrot.lane.b32.xlu0 %v1006, 28
      %v1466 = vpop.permute.xlu0 %1465
      %1467 = vrot.lane.b32.xlu0 %v1008, 28
      %v1468 = vpop.permute.xlu0 %1467
      %1469 = vrot.lane.b32.xlu0 %v1406, 28
      %v1470 = vpop.permute.xlu0 %1469
      %1471 = vrot.lane.b32.xlu0 %v1408, 28
      %v1472 = vpop.permute.xlu0 %1471
      %vm1505 = vcmask 261344
      %1506 = vst.msk [vmem:[#allocation2] sm:$0xff] %vm1505, %v1410
      %1507 = vst.msk [vmem:[#allocation2 + $0x8] sm:$0xff] %vm1505, %v1412
      %1508 = vst.msk [vmem:[#allocation2 + $0x10] sm:$0xff] %vm1505, %v1414
      %1509 = vst.msk [vmem:[#allocation2 + $0x18] sm:$0xff] %vm1505, %v1416
      %1510 = vst.msk [vmem:[#allocation2 + $0x20] sm:$0xff] %vm1505, %v1418
      %1511 = vst.msk [vmem:[#allocation2 + $0x28] sm:$0xff] %vm1505, %v1420
      %1512 = vst.msk [vmem:[#allocation2 + $0x30] sm:$0xff] %vm1505, %v1422
      %1513 = vst.msk [vmem:[#allocation2 + $0x38] sm:$0xff] %vm1505, %v1424
      %1514 = vst.msk [vmem:[#allocation2 + $0x40] sm:$0xff] %vm1505, %v1426
      %1515 = vst.msk [vmem:[#allocation2 + $0x48] sm:$0xff] %vm1505, %v1428
      %1516 = vst.msk [vmem:[#allocation2 + $0x50] sm:$0xff] %vm1505, %v1430
      %1517 = vst.msk [vmem:[#allocation2 + $0x58] sm:$0xff] %vm1505, %v1432
      %1518 = vst.msk [vmem:[#allocation2 + $0x60] sm:$0xff] %vm1505, %v1434
      %1519 = vst.msk [vmem:[#allocation2 + $0x68] sm:$0xff] %vm1505, %v1436
      %1520 = vst.msk [vmem:[#allocation2 + $0x70] sm:$0xff] %vm1505, %v1438
      %1521 = vst.msk [vmem:[#allocation2 + $0x78] sm:$0xff] %vm1505, %v1440
      %1522 = vst.msk [vmem:[#allocation2 + $0x80] sm:$0xff] %vm1505, %v1442
      %1523 = vst.msk [vmem:[#allocation2 + $0x88] sm:$0xff] %vm1505, %v1444
      %1524 = vst.msk [vmem:[#allocation2 + $0x90] sm:$0xff] %vm1505, %v1446
      %1525 = vst.msk [vmem:[#allocation2 + $0x98] sm:$0xff] %vm1505, %v1448
      %1526 = vst.msk [vmem:[#allocation2 + $0xa0] sm:$0xff] %vm1505, %v1450
      %1527 = vst.msk [vmem:[#allocation2 + $0xa8] sm:$0xff] %vm1505, %v1452
      %1528 = vst.msk [vmem:[#allocation2 + $0xb0] sm:$0xff] %vm1505, %v1454
      %1529 = vst.msk [vmem:[#allocation2 + $0xb8] sm:$0xff] %vm1505, %v1456
      %1530 = vst.msk [vmem:[#allocation2 + $0xc0] sm:$0xff] %vm1505, %v1458
      %1531 = vst.msk [vmem:[#allocation2 + $0xc8] sm:$0xff] %vm1505, %v1460
      %1532 = vst.msk [vmem:[#allocation2 + $0xd0] sm:$0xff] %vm1505, %v1462
      %1533 = vst.msk [vmem:[#allocation2 + $0xd8] sm:$0xff] %vm1505, %v1464
      %1534 = vst.msk [vmem:[#allocation2 + $0xe0] sm:$0xff] %vm1505, %v1466
      %1535 = vst.msk [vmem:[#allocation2 + $0xe8] sm:$0xff] %vm1505, %v1468
      %1536 = vst.msk [vmem:[#allocation2 + $0xf0] sm:$0xff] %vm1505, %v1470
      %1537 = vst.msk [vmem:[#allocation2 + $0xf8] sm:$0xff] %vm1505, %v1472
      %v1538 = vrot.slane %v368, 2
      %v1539 = vrot.slane %v369, 2
      %v1540 = vsel %vm662, %v1538, %v1539
      %v1541 = vrot.slane %v370, 2
      %v1542 = vsel %vm662, %v1539, %v1541
      %1543 = vrot.lane.b32.xlu0 %v675, 32
      %v1544 = vpop.permute.xlu0 %1543
      %1545 = vrot.lane.b32.xlu0 %v677, 32
      %v1546 = vpop.permute.xlu0 %1545
      %1547 = vrot.lane.b32.xlu0 %v680, 32
      %v1548 = vpop.permute.xlu0 %1547
      %1549 = vrot.lane.b32.xlu0 %v682, 32
      %v1550 = vpop.permute.xlu0 %1549
      %1551 = vrot.lane.b32.xlu0 %v685, 32
      %v1552 = vpop.permute.xlu0 %1551
      %1553 = vrot.lane.b32.xlu0 %v687, 32
      %v1554 = vpop.permute.xlu0 %1553
      %1555 = vrot.lane.b32.xlu0 %v690, 32
      %v1556 = vpop.permute.xlu0 %1555
      %1557 = vrot.lane.b32.xlu0 %v692, 32
      %v1558 = vpop.permute.xlu0 %1557
      %1559 = vrot.lane.b32.xlu0 %v695, 32
      %v1560 = vpop.permute.xlu0 %1559
      %1561 = vrot.lane.b32.xlu0 %v697, 32
      %v1562 = vpop.permute.xlu0 %1561
      %1563 = vrot.lane.b32.xlu0 %v700, 32
      %v1564 = vpop.permute.xlu0 %1563
      %1565 = vrot.lane.b32.xlu0 %v702, 32
      %v1566 = vpop.permute.xlu0 %1565
      %1567 = vrot.lane.b32.xlu0 %v705, 32
      %v1568 = vpop.permute.xlu0 %1567
      %1569 = vrot.lane.b32.xlu0 %v707, 32
      %v1570 = vpop.permute.xlu0 %1569
      %1571 = vrot.lane.b32.xlu0 %v710, 32
      %v1572 = vpop.permute.xlu0 %1571
      %1573 = vrot.lane.b32.xlu0 %v712, 32
      %v1574 = vpop.permute.xlu0 %1573
      %1575 = vrot.lane.b32.xlu0 %v715, 32
      %v1576 = vpop.permute.xlu0 %1575
      %1577 = vrot.lane.b32.xlu0 %v717, 32
      %v1578 = vpop.permute.xlu0 %1577
      %1579 = vrot.lane.b32.xlu0 %v720, 32
      %v1580 = vpop.permute.xlu0 %1579
      %1581 = vrot.lane.b32.xlu0 %v722, 32
      %v1582 = vpop.permute.xlu0 %1581
      %1583 = vrot.lane.b32.xlu0 %v725, 32
      %v1584 = vpop.permute.xlu0 %1583
      %1585 = vrot.lane.b32.xlu0 %v727, 32
      %v1586 = vpop.permute.xlu0 %1585
      %1587 = vrot.lane.b32.xlu0 %v730, 32
      %v1588 = vpop.permute.xlu0 %1587
      %1589 = vrot.lane.b32.xlu0 %v732, 32
      %v1590 = vpop.permute.xlu0 %1589
      %1591 = vrot.lane.b32.xlu0 %v735, 32
      %v1592 = vpop.permute.xlu0 %1591
      %1593 = vrot.lane.b32.xlu0 %v737, 32
      %v1594 = vpop.permute.xlu0 %1593
      %1595 = vrot.lane.b32.xlu0 %v740, 32
      %v1596 = vpop.permute.xlu0 %1595
      %1597 = vrot.lane.b32.xlu0 %v742, 32
      %v1598 = vpop.permute.xlu0 %1597
      %1599 = vrot.lane.b32.xlu0 %v1140, 32
      %v1600 = vpop.permute.xlu0 %1599
      %1601 = vrot.lane.b32.xlu0 %v1142, 32
      %v1602 = vpop.permute.xlu0 %1601
      %1603 = vrot.lane.b32.xlu0 %v1540, 32
      %v1604 = vpop.permute.xlu0 %1603
      %1605 = vrot.lane.b32.xlu0 %v1542, 32
      %v1606 = vpop.permute.xlu0 %1605
      %vm1639 = vcmask 294144
      %1640 = vst.msk [vmem:[#allocation2] sm:$0xff] %vm1639, %v1544
      %1641 = vst.msk [vmem:[#allocation2 + $0x8] sm:$0xff] %vm1639, %v1546
      %1642 = vst.msk [vmem:[#allocation2 + $0x10] sm:$0xff] %vm1639, %v1548
      %1643 = vst.msk [vmem:[#allocation2 + $0x18] sm:$0xff] %vm1639, %v1550
      %1644 = vst.msk [vmem:[#allocation2 + $0x20] sm:$0xff] %vm1639, %v1552
      %1645 = vst.msk [vmem:[#allocation2 + $0x28] sm:$0xff] %vm1639, %v1554
      %1646 = vst.msk [vmem:[#allocation2 + $0x30] sm:$0xff] %vm1639, %v1556
      %1647 = vst.msk [vmem:[#allocation2 + $0x38] sm:$0xff] %vm1639, %v1558
      %1648 = vst.msk [vmem:[#allocation2 + $0x40] sm:$0xff] %vm1639, %v1560
      %1649 = vst.msk [vmem:[#allocation2 + $0x48] sm:$0xff] %vm1639, %v1562
      %1650 = vst.msk [vmem:[#allocation2 + $0x50] sm:$0xff] %vm1639, %v1564
      %1651 = vst.msk [vmem:[#allocation2 + $0x58] sm:$0xff] %vm1639, %v1566
      %1652 = vst.msk [vmem:[#allocation2 + $0x60] sm:$0xff] %vm1639, %v1568
      %1653 = vst.msk [vmem:[#allocation2 + $0x68] sm:$0xff] %vm1639, %v1570
      %1654 = vst.msk [vmem:[#allocation2 + $0x70] sm:$0xff] %vm1639, %v1572
      %1655 = vst.msk [vmem:[#allocation2 + $0x78] sm:$0xff] %vm1639, %v1574
      %1656 = vst.msk [vmem:[#allocation2 + $0x80] sm:$0xff] %vm1639, %v1576
      %1657 = vst.msk [vmem:[#allocation2 + $0x88] sm:$0xff] %vm1639, %v1578
      %1658 = vst.msk [vmem:[#allocation2 + $0x90] sm:$0xff] %vm1639, %v1580
      %1659 = vst.msk [vmem:[#allocation2 + $0x98] sm:$0xff] %vm1639, %v1582
      %1660 = vst.msk [vmem:[#allocation2 + $0xa0] sm:$0xff] %vm1639, %v1584
      %1661 = vst.msk [vmem:[#allocation2 + $0xa8] sm:$0xff] %vm1639, %v1586
      %1662 = vst.msk [vmem:[#allocation2 + $0xb0] sm:$0xff] %vm1639, %v1588
      %1663 = vst.msk [vmem:[#allocation2 + $0xb8] sm:$0xff] %vm1639, %v1590
      %1664 = vst.msk [vmem:[#allocation2 + $0xc0] sm:$0xff] %vm1639, %v1592
      %1665 = vst.msk [vmem:[#allocation2 + $0xc8] sm:$0xff] %vm1639, %v1594
      %1666 = vst.msk [vmem:[#allocation2 + $0xd0] sm:$0xff] %vm1639, %v1596
      %1667 = vst.msk [vmem:[#allocation2 + $0xd8] sm:$0xff] %vm1639, %v1598
      %1668 = vst.msk [vmem:[#allocation2 + $0xe0] sm:$0xff] %vm1639, %v1600
      %1669 = vst.msk [vmem:[#allocation2 + $0xe8] sm:$0xff] %vm1639, %v1602
      %1670 = vst.msk [vmem:[#allocation2 + $0xf0] sm:$0xff] %vm1639, %v1604
      %1671 = vst.msk [vmem:[#allocation2 + $0xf8] sm:$0xff] %vm1639, %v1606
      %v1672 = vld [vmem:[#allocation2] sm:$0xff]
      %v1673 = vld [vmem:[#allocation2 + $0x8] sm:$0xff]
      %v1674 = vld [vmem:[#allocation2 + $0x10] sm:$0xff]
      %v1675 = vld [vmem:[#allocation2 + $0x18] sm:$0xff]
      %v1676 = vld [vmem:[#allocation2 + $0x20] sm:$0xff]
      %v1677 = vld [vmem:[#allocation2 + $0x28] sm:$0xff]
      %v1678 = vld [vmem:[#allocation2 + $0x30] sm:$0xff]
      %v1679 = vld [vmem:[#allocation2 + $0x38] sm:$0xff]
      %v1680 = vld [vmem:[#allocation2 + $0x40] sm:$0xff]
      %v1681 = vld [vmem:[#allocation2 + $0x48] sm:$0xff]
      %v1682 = vld [vmem:[#allocation2 + $0x50] sm:$0xff]
      %v1683 = vld [vmem:[#allocation2 + $0x58] sm:$0xff]
      %v1684 = vld [vmem:[#allocation2 + $0x60] sm:$0xff]
      %v1685 = vld [vmem:[#allocation2 + $0x68] sm:$0xff]
      %v1686 = vld [vmem:[#allocation2 + $0x70] sm:$0xff]
      %v1687 = vld [vmem:[#allocation2 + $0x78] sm:$0xff]
      %v1688 = vld [vmem:[#allocation2 + $0x80] sm:$0xff]
      %v1689 = vld [vmem:[#allocation2 + $0x88] sm:$0xff]
      %v1690 = vld [vmem:[#allocation2 + $0x90] sm:$0xff]
      %v1691 = vld [vmem:[#allocation2 + $0x98] sm:$0xff]
      %v1692 = vld [vmem:[#allocation2 + $0xa0] sm:$0xff]
      %v1693 = vld [vmem:[#allocation2 + $0xa8] sm:$0xff]
      %v1694 = vld [vmem:[#allocation2 + $0xb0] sm:$0xff]
      %v1695 = vld [vmem:[#allocation2 + $0xb8] sm:$0xff]
      %v1696 = vld [vmem:[#allocation2 + $0xc0] sm:$0xff]
      %v1697 = vld [vmem:[#allocation2 + $0xc8] sm:$0xff]
      %v1698 = vld [vmem:[#allocation2 + $0xd0] sm:$0xff]
      %v1699 = vld [vmem:[#allocation2 + $0xd8] sm:$0xff]
      %v1700 = vld [vmem:[#allocation2 + $0xe0] sm:$0xff]
      %v1701 = vld [vmem:[#allocation2 + $0xe8] sm:$0xff]
      %v1702 = vld [vmem:[#allocation2 + $0xf0] sm:$0xff]
      %v1703 = vld [vmem:[#allocation2 + $0xf8] sm:$0xff]
      %v1704 = vld [vmem:[%s2] sm:$0xff]
      %v1705 = vld [vmem:[%s2 + $0x8] sm:$0xff]
      %v1706 = vld [vmem:[%s2 + $0x10] sm:$0xff]
      %v1707 = vld [vmem:[%s2 + $0x18] sm:$0xff]
      %v1708 = vld [vmem:[%s2 + $0x20] sm:$0xf]
      %v1709 = vld [vmem:[%s3] sm:$0x1]
      %v1711 = vperm.slane %v1709, 0
      %vm1713 = vcmask 293888
      %v1715 = vsel %vm1713, %v1672, 0
      %v1718 = vsel %vm1713, %v1673, 0
      %v1721 = vsel %vm1713, %v1674, 0
      %v1724 = vsel %vm1713, %v1675, 0
      %v1727 = vsel %vm1713, %v1676, 0
      %v1730 = vsel %vm1713, %v1677, 0
      %v1733 = vsel %vm1713, %v1678, 0
      %v1736 = vsel %vm1713, %v1679, 0
      %v1739 = vsel %vm1713, %v1680, 0
      %v1742 = vsel %vm1713, %v1681, 0
      %v1745 = vsel %vm1713, %v1682, 0
      %v1748 = vsel %vm1713, %v1683, 0
      %v1751 = vsel %vm1713, %v1684, 0
      %v1754 = vsel %vm1713, %v1685, 0
      %v1757 = vsel %vm1713, %v1686, 0
      %v1760 = vsel %vm1713, %v1687, 0
      %v1763 = vsel %vm1713, %v1688, 0
      %v1766 = vsel %vm1713, %v1689, 0
      %v1769 = vsel %vm1713, %v1690, 0
      %v1772 = vsel %vm1713, %v1691, 0
      %v1775 = vsel %vm1713, %v1692, 0
      %v1778 = vsel %vm1713, %v1693, 0
      %v1781 = vsel %vm1713, %v1694, 0
      %v1784 = vsel %vm1713, %v1695, 0
      %v1787 = vsel %vm1713, %v1696, 0
      %v1790 = vsel %vm1713, %v1697, 0
      %v1793 = vsel %vm1713, %v1698, 0
      %v1796 = vsel %vm1713, %v1699, 0
      %v1799 = vsel %vm1713, %v1700, 0
      %v1802 = vsel %vm1713, %v1701, 0
      %v1805 = vsel %vm1713, %v1702, 0
      %v1808 = vsel %vm1713, %v1703, 0
      %vm1810 = vcmask 1043456
      %v1812 = vsel %vm1810, %v1708, 0
      %1814 = vmatpush.msra.mxu0 0.0
      %1815 = vmatpush.msra.mxu0 0.0
      %1816 = vmatpush.msra.mxu0 0.0
      %1817 = vmatpush.msra.mxu0 0.0
      %1818 = vmatpush.msra.mxu0 0.0
      %1819 = vmatpush.msra.mxu0 0.0
      %1820 = vmatpush.msra.mxu0 0.0
      %1821 = vmatpush.msra.mxu0 0.0
      %1822 = vmatpush.msra.mxu0 0.0
      %1823 = vmatpush.msra.mxu0 0.0
      %1824 = vmatpush.msra.mxu0 0.0
      %1825 = vmatpush.msra.mxu0 %v1812
      %1826 = vmatpush.msra.mxu0 %v1707
      %1827 = vmatpush.msra.mxu0 %v1706
      %1828 = vmatpush.msra.mxu0 %v1705
      %1829 = vmatpush.msra.mxu0 %v1704
      %1830 = vmatmul.f32.gmra.mxu0 %v1715
      %v1831 = vpop.f32.mrf.mxu0
      %v1832 = vadd.f32 %v1711, %v1831
      %1833 = vmatmul.f32.gmra.mxu0 %v1718
      %v1834 = vpop.f32.mrf.mxu0
      %v1835 = vadd.f32 %v1711, %v1834
      %1836 = vmatmul.f32.gmra.mxu0 %v1721
      %v1837 = vpop.f32.mrf.mxu0
      %v1838 = vadd.f32 %v1711, %v1837
      %1839 = vmatmul.f32.gmra.mxu0 %v1724
      %v1840 = vpop.f32.mrf.mxu0
      %v1841 = vadd.f32 %v1711, %v1840
      %1842 = vmatmul.f32.gmra.mxu0 %v1727
      %v1843 = vpop.f32.mrf.mxu0
      %v1844 = vadd.f32 %v1711, %v1843
      %1845 = vmatmul.f32.gmra.mxu0 %v1730
      %v1846 = vpop.f32.mrf.mxu0
      %v1847 = vadd.f32 %v1711, %v1846
      %1848 = vmatmul.f32.gmra.mxu0 %v1733
      %v1849 = vpop.f32.mrf.mxu0
      %v1850 = vadd.f32 %v1711, %v1849
      %1851 = vmatmul.f32.gmra.mxu0 %v1736
      %v1852 = vpop.f32.mrf.mxu0
      %v1853 = vadd.f32 %v1711, %v1852
      %1854 = vmatmul.f32.gmra.mxu0 %v1739
      %v1855 = vpop.f32.mrf.mxu0
      %v1856 = vadd.f32 %v1711, %v1855
      %1857 = vmatmul.f32.gmra.mxu0 %v1742
      %v1858 = vpop.f32.mrf.mxu0
      %v1859 = vadd.f32 %v1711, %v1858
      %1860 = vmatmul.f32.gmra.mxu0 %v1745
      %v1861 = vpop.f32.mrf.mxu0
      %v1862 = vadd.f32 %v1711, %v1861
      %1863 = vmatmul.f32.gmra.mxu0 %v1748
      %v1864 = vpop.f32.mrf.mxu0
      %v1865 = vadd.f32 %v1711, %v1864
      %1866 = vmatmul.f32.gmra.mxu0 %v1751
      %v1867 = vpop.f32.mrf.mxu0
      %v1868 = vadd.f32 %v1711, %v1867
      %1869 = vmatmul.f32.gmra.mxu0 %v1754
      %v1870 = vpop.f32.mrf.mxu0
      %v1871 = vadd.f32 %v1711, %v1870
      %1872 = vmatmul.f32.gmra.mxu0 %v1757
      %v1873 = vpop.f32.mrf.mxu0
      %v1874 = vadd.f32 %v1711, %v1873
      %1875 = vmatmul.f32.gmra.mxu0 %v1760
      %v1876 = vpop.f32.mrf.mxu0
      %v1877 = vadd.f32 %v1711, %v1876
      %1878 = vmatmul.f32.gmra.mxu0 %v1763
      %v1879 = vpop.f32.mrf.mxu0
      %v1880 = vadd.f32 %v1711, %v1879
      %1881 = vmatmul.f32.gmra.mxu0 %v1766
      %v1882 = vpop.f32.mrf.mxu0
      %v1883 = vadd.f32 %v1711, %v1882
      %1884 = vmatmul.f32.gmra.mxu0 %v1769
      %v1885 = vpop.f32.mrf.mxu0
      %v1886 = vadd.f32 %v1711, %v1885
      %1887 = vmatmul.f32.gmra.mxu0 %v1772
      %v1888 = vpop.f32.mrf.mxu0
      %v1889 = vadd.f32 %v1711, %v1888
      %1890 = vmatmul.f32.gmra.mxu0 %v1775
      %v1891 = vpop.f32.mrf.mxu0
      %v1892 = vadd.f32 %v1711, %v1891
      %1893 = vmatmul.f32.gmra.mxu0 %v1778
      %v1894 = vpop.f32.mrf.mxu0
      %v1895 = vadd.f32 %v1711, %v1894
      %1896 = vmatmul.f32.gmra.mxu0 %v1781
      %v1897 = vpop.f32.mrf.mxu0
      %v1898 = vadd.f32 %v1711, %v1897
      %1899 = vmatmul.f32.gmra.mxu0 %v1784
      %v1900 = vpop.f32.mrf.mxu0
      %v1901 = vadd.f32 %v1711, %v1900
      %1902 = vmatmul.f32.gmra.mxu0 %v1787
      %v1903 = vpop.f32.mrf.mxu0
      %v1904 = vadd.f32 %v1711, %v1903
      %1905 = vmatmul.f32.gmra.mxu0 %v1790
      %v1906 = vpop.f32.mrf.mxu0
      %v1907 = vadd.f32 %v1711, %v1906
      %1908 = vmatmul.f32.gmra.mxu0 %v1793
      %v1909 = vpop.f32.mrf.mxu0
      %v1910 = vadd.f32 %v1711, %v1909
      %1911 = vmatmul.f32.gmra.mxu0 %v1796
      %v1912 = vpop.f32.mrf.mxu0
      %v1913 = vadd.f32 %v1711, %v1912
      %1914 = vmatmul.f32.gmra.mxu0 %v1799
      %v1915 = vpop.f32.mrf.mxu0
      %v1916 = vadd.f32 %v1711, %v1915
      %1917 = vmatmul.f32.gmra.mxu0 %v1802
      %v1918 = vpop.f32.mrf.mxu0
      %v1919 = vadd.f32 %v1711, %v1918
      %1920 = vmatmul.f32.gmra.mxu0 %v1805
      %v1921 = vpop.f32.mrf.mxu0
      %v1922 = vadd.f32 %v1711, %v1921
      %1923 = vmatmul.f32.gmra.mxu0 %v1808
      %v1924 = vpop.f32.mrf.mxu0
      %v1925 = vadd.f32 %v1711, %v1924
      %1926 = vdwg.mxu0
      %vm1927 = vcmp.ge.f32.partialorder %v1832, 0.0
      %vm1928 = vcmp.ge.f32.partialorder %v1835, 0.0
      %vm1929 = vcmp.ge.f32.partialorder %v1838, 0.0
      %vm1930 = vcmp.ge.f32.partialorder %v1841, 0.0
      %vm1931 = vcmp.ge.f32.partialorder %v1844, 0.0
      %vm1932 = vcmp.ge.f32.partialorder %v1847, 0.0
      %vm1933 = vcmp.ge.f32.partialorder %v1850, 0.0
      %vm1934 = vcmp.ge.f32.partialorder %v1853, 0.0
      %vm1935 = vcmp.ge.f32.partialorder %v1856, 0.0
      %vm1936 = vcmp.ge.f32.partialorder %v1859, 0.0
      %vm1937 = vcmp.ge.f32.partialorder %v1862, 0.0
      %vm1938 = vcmp.ge.f32.partialorder %v1865, 0.0
      %vm1939 = vcmp.ge.f32.partialorder %v1868, 0.0
      %vm1940 = vcmp.ge.f32.partialorder %v1871, 0.0
      %vm1941 = vcmp.ge.f32.partialorder %v1874, 0.0
      %vm1942 = vcmp.ge.f32.partialorder %v1877, 0.0
      %vm1943 = vcmp.ge.f32.partialorder %v1880, 0.0
      %vm1944 = vcmp.ge.f32.partialorder %v1883, 0.0
      %vm1945 = vcmp.ge.f32.partialorder %v1886, 0.0
      %vm1946 = vcmp.ge.f32.partialorder %v1889, 0.0
      %vm1947 = vcmp.ge.f32.partialorder %v1892, 0.0
      %vm1948 = vcmp.ge.f32.partialorder %v1895, 0.0
      %vm1949 = vcmp.ge.f32.partialorder %v1898, 0.0
      %vm1950 = vcmp.ge.f32.partialorder %v1901, 0.0
      %vm1951 = vcmp.ge.f32.partialorder %v1904, 0.0
      %vm1952 = vcmp.ge.f32.partialorder %v1907, 0.0
      %vm1953 = vcmp.ge.f32.partialorder %v1910, 0.0
      %vm1954 = vcmp.ge.f32.partialorder %v1913, 0.0
      %vm1955 = vcmp.ge.f32.partialorder %v1916, 0.0
      %vm1956 = vcmp.ge.f32.partialorder %v1919, 0.0
      %vm1957 = vcmp.ge.f32.partialorder %v1922, 0.0
      %vm1958 = vcmp.ge.f32.partialorder %v1925, 0.0
      %v1959 = vmul.f32 %v1832, 0.2
      %v1960 = vmul.f32 %v1835, 0.2
      %v1961 = vmul.f32 %v1838, 0.2
      %v1962 = vmul.f32 %v1841, 0.2
      %v1963 = vmul.f32 %v1844, 0.2
      %v1964 = vmul.f32 %v1847, 0.2
      %v1965 = vmul.f32 %v1850, 0.2
      %v1966 = vmul.f32 %v1853, 0.2
      %v1967 = vmul.f32 %v1856, 0.2
      %v1968 = vmul.f32 %v1859, 0.2
      %v1969 = vmul.f32 %v1862, 0.2
      %v1970 = vmul.f32 %v1865, 0.2
      %v1971 = vmul.f32 %v1868, 0.2
      %v1972 = vmul.f32 %v1871, 0.2
      %v1973 = vmul.f32 %v1874, 0.2
      %v1974 = vmul.f32 %v1877, 0.2
      %v1975 = vmul.f32 %v1880, 0.2
      %v1976 = vmul.f32 %v1883, 0.2
      %v1977 = vmul.f32 %v1886, 0.2
      %v1978 = vmul.f32 %v1889, 0.2
      %v1979 = vmul.f32 %v1892, 0.2
      %v1980 = vmul.f32 %v1895, 0.2
      %v1981 = vmul.f32 %v1898, 0.2
      %v1982 = vmul.f32 %v1901, 0.2
      %v1983 = vmul.f32 %v1904, 0.2
      %v1984 = vmul.f32 %v1907, 0.2
      %v1985 = vmul.f32 %v1910, 0.2
      %v1986 = vmul.f32 %v1913, 0.2
      %v1987 = vmul.f32 %v1916, 0.2
      %v1988 = vmul.f32 %v1919, 0.2
      %v1989 = vmul.f32 %v1922, 0.2
      %v1990 = vmul.f32 %v1925, 0.2
      %v1991 = vsel %vm1927, %v1832, %v1959
      %v1992 = vsel %vm1928, %v1835, %v1960
      %v1993 = vsel %vm1929, %v1838, %v1961
      %v1994 = vsel %vm1930, %v1841, %v1962
      %v1995 = vsel %vm1931, %v1844, %v1963
      %v1996 = vsel %vm1932, %v1847, %v1964
      %v1997 = vsel %vm1933, %v1850, %v1965
      %v1998 = vsel %vm1934, %v1853, %v1966
      %v1999 = vsel %vm1935, %v1856, %v1967
      %v2000 = vsel %vm1936, %v1859, %v1968
      %v2001 = vsel %vm1937, %v1862, %v1969
      %v2002 = vsel %vm1938, %v1865, %v1970
      %v2003 = vsel %vm1939, %v1868, %v1971
      %v2004 = vsel %vm1940, %v1871, %v1972
      %v2005 = vsel %vm1941, %v1874, %v1973
      %v2006 = vsel %vm1942, %v1877, %v1974
      %v2007 = vsel %vm1943, %v1880, %v1975
      %v2008 = vsel %vm1944, %v1883, %v1976
      %v2009 = vsel %vm1945, %v1886, %v1977
      %v2010 = vsel %vm1946, %v1889, %v1978
      %v2011 = vsel %vm1947, %v1892, %v1979
      %v2012 = vsel %vm1948, %v1895, %v1980
      %v2013 = vsel %vm1949, %v1898, %v1981
      %v2014 = vsel %vm1950, %v1901, %v1982
      %v2015 = vsel %vm1951, %v1904, %v1983
      %v2016 = vsel %vm1952, %v1907, %v1984
      %v2017 = vsel %vm1953, %v1910, %v1985
      %v2018 = vsel %vm1954, %v1913, %v1986
      %v2019 = vsel %vm1955, %v1916, %v1987
      %v2020 = vsel %vm1956, %v1919, %v1988
      %v2021 = vsel %vm1957, %v1922, %v1989
      %v2022 = vsel %vm1958, %v1925, %v1990
      %vm2023 = vcmask 64512
      %2024 = vst.msk [vmem:[%s316] sm:$0xff] %vm2023, %v1991
      %2025 = vst.msk [vmem:[%s316 + $0x8] sm:$0xff] %vm2023, %v1992
      %2026 = vst.msk [vmem:[%s316 + $0x10] sm:$0xff] %vm2023, %v1993
      %2027 = vst.msk [vmem:[%s316 + $0x18] sm:$0xff] %vm2023, %v1994
      %2028 = vst.msk [vmem:[%s316 + $0x20] sm:$0xff] %vm2023, %v1995
      %2029 = vst.msk [vmem:[%s316 + $0x28] sm:$0xff] %vm2023, %v1996
      %2030 = vst.msk [vmem:[%s316 + $0x30] sm:$0xff] %vm2023, %v1997
      %2031 = vst.msk [vmem:[%s316 + $0x38] sm:$0xff] %vm2023, %v1998
      %2032 = vst.msk [vmem:[%s316 + $0x40] sm:$0xff] %vm2023, %v1999
      %2033 = vst.msk [vmem:[%s316 + $0x48] sm:$0xff] %vm2023, %v2000
      %2034 = vst.msk [vmem:[%s316 + $0x50] sm:$0xff] %vm2023, %v2001
      %2035 = vst.msk [vmem:[%s316 + $0x58] sm:$0xff] %vm2023, %v2002
      %2036 = vst.msk [vmem:[%s316 + $0x60] sm:$0xff] %vm2023, %v2003
      %2037 = vst.msk [vmem:[%s316 + $0x68] sm:$0xff] %vm2023, %v2004
      %2038 = vst.msk [vmem:[%s316 + $0x70] sm:$0xff] %vm2023, %v2005
      %2039 = vst.msk [vmem:[%s316 + $0x78] sm:$0xff] %vm2023, %v2006
      %2040 = vst.msk [vmem:[%s316 + $0x80] sm:$0xff] %vm2023, %v2007
      %2041 = vst.msk [vmem:[%s316 + $0x88] sm:$0xff] %vm2023, %v2008
      %2042 = vst.msk [vmem:[%s316 + $0x90] sm:$0xff] %vm2023, %v2009
      %2043 = vst.msk [vmem:[%s316 + $0x98] sm:$0xff] %vm2023, %v2010
      %2044 = vst.msk [vmem:[%s316 + $0xa0] sm:$0xff] %vm2023, %v2011
      %2045 = vst.msk [vmem:[%s316 + $0xa8] sm:$0xff] %vm2023, %v2012
      %2046 = vst.msk [vmem:[%s316 + $0xb0] sm:$0xff] %vm2023, %v2013
      %2047 = vst.msk [vmem:[%s316 + $0xb8] sm:$0xff] %vm2023, %v2014
      %2048 = vst.msk [vmem:[%s316 + $0xc0] sm:$0xff] %vm2023, %v2015
      %2049 = vst.msk [vmem:[%s316 + $0xc8] sm:$0xff] %vm2023, %v2016
      %2050 = vst.msk [vmem:[%s316 + $0xd0] sm:$0xff] %vm2023, %v2017
      %2051 = vst.msk [vmem:[%s316 + $0xd8] sm:$0xff] %vm2023, %v2018
      %2052 = vst.msk [vmem:[%s316 + $0xe0] sm:$0xff] %vm2023, %v2019
      %2053 = vst.msk [vmem:[%s316 + $0xe8] sm:$0xff] %vm2023, %v2020
      %2054 = vst.msk [vmem:[%s316 + $0xf0] sm:$0xff] %vm2023, %v2021
      %2055 = vst.msk [vmem:[%s316 + $0xf8] sm:$0xff] %vm2023, %v2022
      %p2056 = scmp.lt.s32.totalorder %s19, 1
      %s2057 = scalar_select %p2056, %s19, 1
      %p2058 = scmp.lt.s32.totalorder %s20, 0
      %s2059 = scalar_select %p2058, %s20, 0
      %s2060 = smul.addr %s2059, 32
      %s2061 = smul.addr %s2057, 32
      %s2062 = sadd.s32 %s2060, %s2061
      %s2063 = smul.addr %s2062, 8
      %s2064 = scalar_lea.vmem %s4, %s2063
      // Predicated region
      $region37: #{tpu_custom_call.1} parent=35 // pred_check
        %p2065 = pneg %p149
      $region38: #{tpu_custom_call.1} parent=35 // pred_check_branch
        %2067 = sbr.rel (%p2065) target = $region40
      $region39: #{tpu_custom_call.1} parent=35 // pred_region
        _
      $region40: #{tpu_custom_call.1} parent=35 // pred_fallthru
        _
    $region36: #{tpu_custom_call.1} parent=5 // pred_fallthru
      _
    %p2068 = scmp.le.s32.totalorder 2, %s10
    // Predicated region
    $region41: #{tpu_custom_call.1} parent=5 // pred_check
      %p2069 = pneg %p2068
    $region42: #{tpu_custom_call.1} parent=5 // pred_check_branch
      %2071 = sbr.rel (%p2069) target = $region44
    $region43: #{tpu_custom_call.1} parent=5 // pred_region
      %s2072 = ssub.s32 %s10, 2
      // Predicated region
      $region45: #{tpu_custom_call.1} parent=43 // pred_check
        %p2073 = pneg %p155
      $region46: #{tpu_custom_call.1} parent=43 // pred_check_branch
        %2075 = sbr.rel (%p2073) target = $region48
      $region47: #{tpu_custom_call.1} parent=43 // pred_region
        %p2076 = scmp.lt.s32.totalorder %s21, 1
        %s2077 = scalar_select %p2076, %s21, 1
        %p2078 = scmp.lt.s32.totalorder %s22, 0
        %s2079 = scalar_select %p2078, %s22, 0
        %s2080 = smul.addr %s2079, 32
        %s2081 = smul.addr %s2077, 32
        %s2082 = sadd.s32 %s2080, %s2081
        %s2083 = smul.addr %s2082, 8
        %s2084 = scalar_lea.vmem %s4, %s2083
      $region48: #{tpu_custom_call.1} parent=43 // pred_fallthru
        _
    $region44: #{tpu_custom_call.1} parent=5 // pred_fallthru
      _
  $region6: #{tpu_custom_call.1} parent=0 // loop_footer
    %s14 = sadd.s32 1, %s10
  $region7: #{tpu_custom_call.1} parent=0 // loop_footer_branch
    %9 = sbr.rel target = $region3
  $region8: #{tpu_custom_call.1} parent=0 // loop_exit
    _

</llo_original>
